<compile_context>
chip_gen: v6e
topology: v6e:2x2x1
jax: 0.10.0
libtpu: 0.0.40
codegen_flags: <defaults>
</compile_context>

<pallas_src>
import functools

import jax
import jax.numpy as jnp
from jax.experimental import pallas as pl
from jax.experimental.pallas import tpu as pltpu

BN_EPS = 1e-5


def _vmem_limit_bytes():
    """Generation-aware scoped-VMEM limit: ~half of physical VMEM, capped."""
    cap = 128 * 1024 * 1024
    try:
        cap = int(getattr(pltpu.get_tpu_info(), "vmem_capacity_bytes", cap))
    except Exception:
        pass
    return int(min(cap // 2, 96 * 1024 * 1024))


def _row_chunk(h, cap=256):
    """Largest divisor of h that is <= cap (matmul M rows per chunk)."""
    best = 1
    for d in range(1, h + 1):
        if h % d == 0 and d <= cap:
            best = d
    return best


def _band_weights(w_hwio, W):
    """Fold a 3x3 conv (padding=1, stride=1) into 3 banded matrices.

    Returns band of shape (3, W*Cin, W*Cout) with
      band[dy, j*Cin+ci, w*Cout+co] = w_hwio[dy, dx, ci, co]  where dx = j-w+1
    (zero outside the band).  Horizontal zero-padding is implicit: edge output
    columns simply have truncated bands, so the kernel only needs vertical
    padding rows.
    """
    KH, KW, Cin, Cout = w_hwio.shape
    assert KH == 3 and KW == 3
    j = jnp.arange(W)[:, None]
    w = jnp.arange(W)[None, :]
    masks = jnp.stack(
        [(j == (w + dx - 1)).astype(w_hwio.dtype) for dx in range(KW)], axis=0)  # (3, W, W)
    band = jnp.einsum('dkio,kjw->djiwo', w_hwio, masks)        # (3, W, Cin, W, Cout)
    return band.reshape(KH, W * Cin, W * Cout)


def _conv_stats_kernel(*refs, H, W, Cin, Cout, RH, apply_input_act):
    """3x3 conv (pad=1, stride=1) for one image in lane-dense (H, W*C) layout.

    If apply_input_act, the previous block's folded BN+ReLU (per-channel scale/
    shift tiled over W, then max(.,0)) is applied to the input before the conv;
    the zero halo rows stay zero, preserving PyTorch's zero-padding semantics.
    Also emits per-image partial BN statistics (sum, sum of squares) laid out
    as (2, W*Cout) lane-dense vectors (folded per-channel in the wrapper).
    """
    if apply_input_act:
        s_in_ref, t_in_ref, x_ref, w_ref, z_ref, stats_ref, pad_ref = refs
    else:
        x_ref, w_ref, z_ref, stats_ref, pad_ref = refs
        s_in_ref = t_in_ref = None

    WI = W * Cin
    WC = W * Cout

    # Zero only the two vertical halo rows every step (cheap, and safe under
    # megacore grid sharding where a core's first step need not be id 0).
    # Interior rows are fully overwritten below; horizontal padding is folded
    # into the banded weights, so no halo columns exist.
    zrow = jnp.zeros((1, WI), pad_ref.dtype)
    pad_ref[0:1, :] = zrow
    pad_ref[H + 1:H + 2, :] = zrow

    x = x_ref[0]                                               # (H, W*Cin) bf16
    if apply_input_act:
        x = jnp.maximum(x.astype(jnp.float32) * s_in_ref[...] + t_in_ref[...], 0.0)
        x = x.astype(pad_ref.dtype)
    pad_ref[1:H + 1, :] = x

    # Conv bias omitted on purpose: it cancels exactly in the training-mode
    # BatchNorm mean subtraction that always follows.
    ssum = jnp.zeros((1, WC), jnp.float32)
    qsum = jnp.zeros((1, WC), jnp.float32)
    # Static chunk loop: H//RH is tiny here (1).  Switch to lax.fori_loop if
    # chunk counts grow at real sizes.
    for ck in range(H // RH):
        r0 = ck * RH
        acc = jnp.zeros((RH, WC), jnp.float32)
        for dy in range(3):
            acc = acc + jnp.dot(pad_ref[r0 + dy:r0 + dy + RH, :], w_ref[dy],
                                preferred_element_type=jnp.float32)
        ssum = ssum + jnp.sum(acc, axis=0, keepdims=True)
        # Note: E[x^2]-E[x]^2 in f32; fine at these magnitudes/counts.
        qsum = qsum + jnp.sum(acc * acc, axis=0, keepdims=True)
        z_ref[0, r0:r0 + RH, :] = acc.astype(z_ref.dtype)      # lane-dense store

    stats_ref[0, 0:1, :] = ssum
    stats_ref[0, 1:2, :] = qsum


def _bn_relu_kernel(s_ref, t_ref, z_ref, o_ref):
    """Final folded BN + ReLU: y = max(z*scale + shift, 0), all lane-dense."""
    o_ref[0] = jnp.maximum(
        z_ref[0].astype(jnp.float32) * s_ref[...] + t_ref[...], 0.0)


def _conv_stats_pass(x, w_band, s_in, t_in, *, H, W, Cin, Cout,
                     apply_input_act, vmem_limit):
    N = x.shape[0]
    RH = _row_chunk(H)
    kernel = functools.partial(
        _conv_stats_kernel, H=H, W=W, Cin=Cin, Cout=Cout, RH=RH,
        apply_input_act=apply_input_act)

    in_specs = [
        pl.BlockSpec((1, H, W * Cin), lambda n: (n, 0, 0)),        # activations
        pl.BlockSpec((3, W * Cin, W * Cout), lambda n: (0, 0, 0)), # banded weights
    ]
    args = [x, w_band]
    if apply_input_act:
        in_specs = [pl.BlockSpec((1, W * Cin), lambda n: (0, 0)),  # prev-BN scale
                    pl.BlockSpec((1, W * Cin), lambda n: (0, 0))   # prev-BN shift
                    ] + in_specs
        args = [s_in, t_in] + args

    z, stats = pl.pallas_call(
        kernel,
        out_shape=(jax.ShapeDtypeStruct((N, H, W * Cout), jnp.bfloat16),
                   jax.ShapeDtypeStruct((N, 2, W * Cout), jnp.float32)),
        grid_spec=pltpu.PrefetchScalarGridSpec(
            num_scalar_prefetch=0,
            grid=(N,),
            in_specs=in_specs,
            out_specs=[pl.BlockSpec((1, H, W * Cout), lambda n: (n, 0, 0)),
                       pl.BlockSpec((1, 2, W * Cout), lambda n: (n, 0, 0))],
            scratch_shapes=[pltpu.VMEM((H + 2, W * Cin), jnp.bfloat16)]),
        compiler_params=pltpu.CompilerParams(
            dimension_semantics=("parallel",),
            vmem_limit_bytes=vmem_limit),
    )(*args)
    return z, stats


def _bn_relu_pass(z, scale_t, shift_t, vmem_limit):
    N, H, WC = z.shape
    return pl.pallas_call(
        _bn_relu_kernel,
        out_shape=jax.ShapeDtypeStruct((N, H, WC), jnp.float32),
        grid_spec=pltpu.PrefetchScalarGridSpec(
            num_scalar_prefetch=0,
            grid=(N,),
            in_specs=[pl.BlockSpec((1, WC), lambda n: (0, 0)),
                      pl.BlockSpec((1, WC), lambda n: (0, 0)),
                      pl.BlockSpec((1, H, WC), lambda n: (n, 0, 0))],
            out_specs=pl.BlockSpec((1, H, WC), lambda n: (n, 0, 0))),
        compiler_params=pltpu.CompilerParams(
            dimension_semantics=("parallel",),
            vmem_limit_bytes=vmem_limit),
    )(scale_t, shift_t, z)


def _fold_bn(stats, gamma, beta, count, W, Cout):
    """Global batch stats -> per-channel scale/shift (training mode, biased var)."""
    s = stats.reshape(stats.shape[0], 2, W, Cout).sum(axis=(0, 2))   # (2, Cout)
    mean = s[0] / count
    var = jnp.maximum(s[1] / count - mean * mean, 0.0)
    scale = (gamma * jax.lax.rsqrt(var + BN_EPS)).astype(jnp.float32)
    shift = (beta - mean * scale).astype(jnp.float32)
    return scale, shift


def _tile_channels(v, W):
    """(C,) per-channel vector -> (1, W*C) lane-dense vector (index w*C + c)."""
    return jnp.tile(v.astype(jnp.float32), W).reshape(1, -1)


def conv_conv_forward(x_nchw, params):
    """Equivalent of conv_conv.forward; input/output in NCHW like PyTorch."""
    N, Cin, H, W = x_nchw.shape
    Cout = params["w1"].shape[-1]
    count = N * H * W
    vmem = _vmem_limit_bytes()

    # NCHW -> NHWC, direct cast to bf16, fold (W, C) into the lane axis.
    x = jnp.transpose(x_nchw, (0, 2, 3, 1)).astype(jnp.bfloat16).reshape(N, H, W * Cin)

    w1b = _band_weights(params["w1"], W).astype(jnp.bfloat16)   # (3, W*Cin,  W*Cout)
    w2b = _band_weights(params["w2"], W).astype(jnp.bfloat16)   # (3, W*Cout, W*Cout)
    # Conv biases b1/b2 are intentionally not used: bias + training-mode BN
    # cancels exactly in the mean subtraction (output bit-identical in exact
    # arithmetic).

    # pass 1: conv1 + partial BN1 stats
    z1, st1 = _conv_stats_pass(x, w1b, None, None, H=H, W=W, Cin=Cin, Cout=Cout,
                               apply_input_act=False, vmem_limit=vmem)
    s1, t1 = _fold_bn(st1, params["g1"], params["be1"], count, W, Cout)

    # pass 2: BN1+ReLU fused into conv2's input stage, conv2 + partial BN2 stats
    z2, st2 = _conv_stats_pass(z1, w2b, _tile_channels(s1, W), _tile_channels(t1, W),
                               H=H, W=W, Cin=Cout, Cout=Cout,
                               apply_input_act=True, vmem_limit=vmem)
    s2, t2 = _fold_bn(st2, params["g2"], params["be2"], count, W, Cout)

    # pass 3: BN2 + ReLU (pure lane-dense elementwise pass)
    y = _bn_relu_pass(z2, _tile_channels(s2, W), _tile_channels(t2, W), vmem)
    y = y.reshape(N, H, W, Cout)
    return jnp.transpose(y, (0, 3, 1, 2))                          # NHWC -> NCHW
    # TODO(synk): BatchNorm running_mean/running_var momentum updates are training
    # state (not part of the forward output) and are not computed here.


def init_params(key, cin, cout):
    """Deterministic synthetic parameters. PyTorch Conv2d weights are (Cout,Cin,3,3);
    transposed to HWIO = (3,3,Cin,Cout) for the kernel/reference."""
    ks = jax.random.split(key, 8)
    w1 = jax.random.normal(ks[0], (cout, cin, 3, 3), jnp.float32) * 0.1
    w2 = jax.random.normal(ks[1], (cout, cout, 3, 3), jnp.float32) * 0.1
    return dict(
        w1=jnp.transpose(w1, (2, 3, 1, 0)),
        b1=jax.random.normal(ks[2], (cout,), jnp.float32) * 0.05,
        g1=1.0 + 0.1 * jax.random.normal(ks[3], (cout,), jnp.float32),
        be1=0.1 * jax.random.normal(ks[4], (cout,), jnp.float32),
        w2=jnp.transpose(w2, (2, 3, 1, 0)),
        b2=jax.random.normal(ks[5], (cout,), jnp.float32) * 0.05,
        g2=1.0 + 0.1 * jax.random.normal(ks[6], (cout,), jnp.float32),
        be2=0.1 * jax.random.normal(ks[7], (cout,), jnp.float32),
    )


def reference_forward(x_nchw, params):
    """Pure-JAX f32 reference (XLA conv, with bias) for validation."""
    def block(x, w_hwio, b, g, be):
        y = jax.lax.conv_general_dilated(
            x, w_hwio, window_strides=(1, 1), padding="SAME",
            dimension_numbers=("NCHW", "HWIO", "NCHW"))
        y = y + b.reshape(1, -1, 1, 1)
        mean = jnp.mean(y, axis=(0, 2, 3), keepdims=True)
        var = jnp.mean((y - mean) ** 2, axis=(0, 2, 3), keepdims=True)
        y = (y - mean) * jax.lax.rsqrt(var + BN_EPS)
        y = y * g.reshape(1, -1, 1, 1) + be.reshape(1, -1, 1, 1)
        return jnp.maximum(y, 0.0)

    y = block(x_nchw, params["w1"], params["b1"], params["g1"], params["be1"])
    y = block(y, params["w2"], params["b2"], params["g2"], params["be2"])
    return y


if __name__ == "__main__":
    N, Cin, Cout, H, W = 2, 4, 8, 16, 16
    key = jax.random.PRNGKey(0)
    kx, kp = jax.random.split(key)
    x = jax.random.normal(kx, (N, Cin, H, W), jnp.float32)
    params = init_params(kp, Cin, Cout)

    out = jax.jit(conv_conv_forward)(x, params)
    out = jax.block_until_ready(out)

    assert out.shape == (N, Cout, H, W), out.shape
    ref = reference_forward(x, params)
    max_err = float(jnp.max(jnp.abs(out - ref)))
    # bf16 matmul operands / bf16 HBM intermediates vs the f32 XLA reference.
    assert jnp.allclose(out, ref, atol=5e-2, rtol=5e-2), f"max abs err = {max_err}"

    print("KERNEL_OK")
</pallas_src>

<mosaic_0001>
module attributes {stable_mosaic.version = 11 : i64} {
  func.func @_conv_stats_kernel(%arg0: i32, %arg1: memref<1x16x64xbf16, #tpu.memory_space<vmem>>, %arg2: memref<3x64x128xbf16, #tpu.memory_space<vmem>>, %arg3: memref<1x16x128xbf16, #tpu.memory_space<vmem>>, %arg4: memref<1x2x128xf32, #tpu.memory_space<vmem>>, %arg5: memref<18x64xbf16, #tpu.memory_space<vmem>>) attributes {dimension_semantics = [#tpu.dimension_semantics<parallel>], iteration_bounds = array<i64: 2>, scalar_prefetch = 0 : i64, scratch_operands = 1 : i64, tpu.core_type = #tpu.core_type<tc>, window_params = [{transform_indices = @transform_0, window_bounds = array<i64: 1, 16, 64>}, {pipeline_mode = #tpu.pipeline_mode<synchronous>, transform_indices = @transform_1, window_bounds = array<i64: 3, 64, 128>}, {transform_indices = @transform_2, window_bounds = array<i64: 1, 16, 128>}, {transform_indices = @transform_3, window_bounds = array<i64: 1, 2, 128>}]} {
    %cst = arith.constant 0.000000e+00 : bf16
    %0 = vector.broadcast %cst : bf16 to vector<1x64xbf16>
    %c0 = arith.constant 0 : index
    %c0_0 = arith.constant 0 : index
    %1 = vector.load %arg5[%c0, %c0_0] : memref<18x64xbf16, #tpu.memory_space<vmem>>, vector<1x64xbf16>
    tpu.vector_store %arg5[%c0, %c0_0], %0 {strides = array<i32>} : memref<18x64xbf16, #tpu.memory_space<vmem>>, vector<1x64xbf16>,
    %c17 = arith.constant 17 : index
    %c0_1 = arith.constant 0 : index
    %2 = vector.load %arg5[%c17, %c0_1] : memref<18x64xbf16, #tpu.memory_space<vmem>>, vector<1x64xbf16>
    tpu.vector_store %arg5[%c17, %c0_1], %0 {strides = array<i32>} : memref<18x64xbf16, #tpu.memory_space<vmem>>, vector<1x64xbf16>,
    %c0_2 = arith.constant 0 : index
    %c0_3 = arith.constant 0 : index
    %c0_4 = arith.constant 0 : index
    %3 = vector.load %arg1[%c0_2, %c0_3, %c0_4] : memref<1x16x64xbf16, #tpu.memory_space<vmem>>, vector<1x16x64xbf16>
    %4 = vector.shape_cast %3 : vector<1x16x64xbf16> to vector<16x64xbf16>
    %c1 = arith.constant 1 : index
    %c0_5 = arith.constant 0 : index
    %5 = vector.load %arg5[%c1, %c0_5] : memref<18x64xbf16, #tpu.memory_space<vmem>>, vector<16x64xbf16>
    tpu.vector_store %arg5[%c1, %c0_5], %4 {strides = array<i32>} : memref<18x64xbf16, #tpu.memory_space<vmem>>, vector<16x64xbf16>,
    %cst_6 = arith.constant 0.000000e+00 : f32
    %6 = vector.broadcast %cst_6 : f32 to vector<1x128xf32>
    %cst_7 = arith.constant 0.000000e+00 : f32
    %7 = vector.broadcast %cst_7 : f32 to vector<1x128xf32>
    %cst_8 = arith.constant 0.000000e+00 : f32
    %8 = vector.broadcast %cst_8 : f32 to vector<16x128xf32>
    %c0_9 = arith.constant 0 : index
    %c0_10 = arith.constant 0 : index
    %9 = vector.load %arg5[%c0_9, %c0_10] : memref<18x64xbf16, #tpu.memory_space<vmem>>, vector<16x64xbf16>
    %c0_11 = arith.constant 0 : index
    %c0_12 = arith.constant 0 : index
    %c0_13 = arith.constant 0 : index
    %10 = vector.load %arg2[%c0_11, %c0_12, %c0_13] : memref<3x64x128xbf16, #tpu.memory_space<vmem>>, vector<1x64x128xbf16>
    %11 = vector.shape_cast %10 : vector<1x64x128xbf16> to vector<64x128xbf16>
    %cst_14 = arith.constant dense<0.000000e+00> : vector<16x128xf32>
    %12 = tpu.matmul %9, %11, %cst_14 {dimension_numbers = #tpu.dot_dimension_numbers<[1], [0], [0], [1], [0, 0, 1, 1], [], []>} : vector<16x64xbf16>, vector<64x128xbf16>, vector<16x128xf32> -> vector<16x128xf32>
    %13 = arith.addf %8, %12 : vector<16x128xf32>
    %c1_15 = arith.constant 1 : index
    %c0_16 = arith.constant 0 : index
    %14 = vector.load %arg5[%c1_15, %c0_16] : memref<18x64xbf16, #tpu.memory_space<vmem>>, vector<16x64xbf16>
    %c1_17 = arith.constant 1 : index
    %c0_18 = arith.constant 0 : index
    %c0_19 = arith.constant 0 : index
    %15 = vector.load %arg2[%c1_17, %c0_18, %c0_19] : memref<3x64x128xbf16, #tpu.memory_space<vmem>>, vector<1x64x128xbf16>
    %16 = vector.shape_cast %15 : vector<1x64x128xbf16> to vector<64x128xbf16>
    %cst_20 = arith.constant dense<0.000000e+00> : vector<16x128xf32>
    %17 = tpu.matmul %14, %16, %cst_20 {dimension_numbers = #tpu.dot_dimension_numbers<[1], [0], [0], [1], [0, 0, 1, 1], [], []>} : vector<16x64xbf16>, vector<64x128xbf16>, vector<16x128xf32> -> vector<16x128xf32>
    %18 = arith.addf %13, %17 : vector<16x128xf32>
    %c2 = arith.constant 2 : index
    %c0_21 = arith.constant 0 : index
    %19 = vector.load %arg5[%c2, %c0_21] : memref<18x64xbf16, #tpu.memory_space<vmem>>, vector<16x64xbf16>
    %c2_22 = arith.constant 2 : index
    %c0_23 = arith.constant 0 : index
    %c0_24 = arith.constant 0 : index
    %20 = vector.load %arg2[%c2_22, %c0_23, %c0_24] : memref<3x64x128xbf16, #tpu.memory_space<vmem>>, vector<1x64x128xbf16>
    %21 = vector.shape_cast %20 : vector<1x64x128xbf16> to vector<64x128xbf16>
    %cst_25 = arith.constant dense<0.000000e+00> : vector<16x128xf32>
    %22 = tpu.matmul %19, %21, %cst_25 {dimension_numbers = #tpu.dot_dimension_numbers<[1], [0], [0], [1], [0, 0, 1, 1], [], []>} : vector<16x64xbf16>, vector<64x128xbf16>, vector<16x128xf32> -> vector<16x128xf32>
    %23 = arith.addf %18, %22 : vector<16x128xf32>
    %cst_26 = arith.constant dense<0.000000e+00> : vector<128xf32>
    %24 = vector.multi_reduction <add>, %23, %cst_26 [0] : vector<16x128xf32> to vector<128xf32>
    %25 = vector.shape_cast %24 : vector<128xf32> to vector<1x128xf32>
    %26 = arith.addf %6, %25 : vector<1x128xf32>
    %27 = arith.mulf %23, %23 : vector<16x128xf32>
    %cst_27 = arith.constant dense<0.000000e+00> : vector<128xf32>
    %28 = vector.multi_reduction <add>, %27, %cst_27 [0] : vector<16x128xf32> to vector<128xf32>
    %29 = vector.shape_cast %28 : vector<128xf32> to vector<1x128xf32>
    %30 = arith.addf %7, %29 : vector<1x128xf32>
    %31 = arith.truncf %23 : vector<16x128xf32> to vector<16x128xbf16>
    %c0_28 = arith.constant 0 : index
    %c0_29 = arith.constant 0 : index
    %c0_30 = arith.constant 0 : index
    %32 = vector.load %arg3[%c0_28, %c0_29, %c0_30] : memref<1x16x128xbf16, #tpu.memory_space<vmem>>, vector<1x16x128xbf16>
    %33 = vector.shape_cast %32 : vector<1x16x128xbf16> to vector<16x128xbf16>
    %34 = vector.shape_cast %31 : vector<16x128xbf16> to vector<1x16x128xbf16>
    tpu.vector_store %arg3[%c0_28, %c0_29, %c0_30], %34 {strides = array<i32>} : memref<1x16x128xbf16, #tpu.memory_space<vmem>>, vector<1x16x128xbf16>,
    %c0_31 = arith.constant 0 : index
    %c0_32 = arith.constant 0 : index
    %c0_33 = arith.constant 0 : index
    %35 = vector.load %arg4[%c0_31, %c0_32, %c0_33] : memref<1x2x128xf32, #tpu.memory_space<vmem>>, vector<1x1x128xf32>
    %36 = vector.shape_cast %35 : vector<1x1x128xf32> to vector<1x128xf32>
    %37 = vector.shape_cast %26 : vector<1x128xf32> to vector<1x1x128xf32>
    tpu.vector_store %arg4[%c0_31, %c0_32, %c0_33], %37 {strides = array<i32>} : memref<1x2x128xf32, #tpu.memory_space<vmem>>, vector<1x1x128xf32>,
    %c0_34 = arith.constant 0 : index
    %c1_35 = arith.constant 1 : index
    %c0_36 = arith.constant 0 : index
    %38 = vector.load %arg4[%c0_34, %c1_35, %c0_36] : memref<1x2x128xf32, #tpu.memory_space<vmem>>, vector<1x1x128xf32>
    %39 = vector.shape_cast %38 : vector<1x1x128xf32> to vector<1x128xf32>
    %40 = vector.shape_cast %30 : vector<1x128xf32> to vector<1x1x128xf32>
    tpu.vector_store %arg4[%c0_34, %c1_35, %c0_36], %40 {strides = array<i32>} : memref<1x2x128xf32, #tpu.memory_space<vmem>>, vector<1x1x128xf32>,
    return
  }
  func.func @transform_0(%arg0: i32) -> (i32, i32, i32) {
    %c0_i32 = arith.constant 0 : i32
    %c0_i32_0 = arith.constant 0 : i32
    %c0_i32_1 = arith.constant 0 : i32
    return %arg0, %c0_i32, %c0_i32_0 : i32, i32, i32
  }
  func.func @transform_1(%arg0: i32) -> (i32, i32, i32) {
    %c0_i32 = arith.constant 0 : i32
    %c0_i32_0 = arith.constant 0 : i32
    %c0_i32_1 = arith.constant 0 : i32
    %c0_i32_2 = arith.constant 0 : i32
    return %c0_i32, %c0_i32_0, %c0_i32_1 : i32, i32, i32
  }
  func.func @transform_2(%arg0: i32) -> (i32, i32, i32) {
    %c0_i32 = arith.constant 0 : i32
    %c0_i32_0 = arith.constant 0 : i32
    %c0_i32_1 = arith.constant 0 : i32
    return %arg0, %c0_i32, %c0_i32_0 : i32, i32, i32
  }
  func.func @transform_3(%arg0: i32) -> (i32, i32, i32) {
    %c0_i32 = arith.constant 0 : i32
    %c0_i32_0 = arith.constant 0 : i32
    %c0_i32_1 = arith.constant 0 : i32
    return %arg0, %c0_i32, %c0_i32_0 : i32, i32, i32
  }
}

module attributes {stable_mosaic.version = 11 : i64} {
  func.func @_conv_stats_kernel(%arg0: i32, %arg1: memref<1x128xf32, #tpu.memory_space<vmem>>, %arg2: memref<1x128xf32, #tpu.memory_space<vmem>>, %arg3: memref<1x16x128xbf16, #tpu.memory_space<vmem>>, %arg4: memref<3x128x128xbf16, #tpu.memory_space<vmem>>, %arg5: memref<1x16x128xbf16, #tpu.memory_space<vmem>>, %arg6: memref<1x2x128xf32, #tpu.memory_space<vmem>>, %arg7: memref<18x128xbf16, #tpu.memory_space<vmem>>) attributes {dimension_semantics = [#tpu.dimension_semantics<parallel>], iteration_bounds = array<i64: 2>, scalar_prefetch = 0 : i64, scratch_operands = 1 : i64, tpu.core_type = #tpu.core_type<tc>, window_params = [{pipeline_mode = #tpu.pipeline_mode<synchronous>, transform_indices = @transform_0, window_bounds = array<i64: 1, 128>}, {pipeline_mode = #tpu.pipeline_mode<synchronous>, transform_indices = @transform_1, window_bounds = array<i64: 1, 128>}, {transform_indices = @transform_2, window_bounds = array<i64: 1, 16, 128>}, {pipeline_mode = #tpu.pipeline_mode<synchronous>, transform_indices = @transform_3, window_bounds = array<i64: 3, 128, 128>}, {transform_indices = @transform_4, window_bounds = array<i64: 1, 16, 128>}, {transform_indices = @transform_5, window_bounds = array<i64: 1, 2, 128>}]} {
    %cst = arith.constant 0.000000e+00 : bf16
    %0 = vector.broadcast %cst : bf16 to vector<1x128xbf16>
    %c0 = arith.constant 0 : index
    %c0_0 = arith.constant 0 : index
    %1 = vector.load %arg7[%c0, %c0_0] : memref<18x128xbf16, #tpu.memory_space<vmem>>, vector<1x128xbf16>
    tpu.vector_store %arg7[%c0, %c0_0], %0 {strides = array<i32>} : memref<18x128xbf16, #tpu.memory_space<vmem>>, vector<1x128xbf16>,
    %c17 = arith.constant 17 : index
    %c0_1 = arith.constant 0 : index
    %2 = vector.load %arg7[%c17, %c0_1] : memref<18x128xbf16, #tpu.memory_space<vmem>>, vector<1x128xbf16>
    tpu.vector_store %arg7[%c17, %c0_1], %0 {strides = array<i32>} : memref<18x128xbf16, #tpu.memory_space<vmem>>, vector<1x128xbf16>,
    %c0_2 = arith.constant 0 : index
    %c0_3 = arith.constant 0 : index
    %c0_4 = arith.constant 0 : index
    %3 = vector.load %arg3[%c0_2, %c0_3, %c0_4] : memref<1x16x128xbf16, #tpu.memory_space<vmem>>, vector<1x16x128xbf16>
    %4 = vector.shape_cast %3 : vector<1x16x128xbf16> to vector<16x128xbf16>
    %5 = arith.extf %4 : vector<16x128xbf16> to vector<16x128xf32>
    %c0_5 = arith.constant 0 : index
    %c0_6 = arith.constant 0 : index
    %6 = vector.load %arg1[%c0_5, %c0_6] : memref<1x128xf32, #tpu.memory_space<vmem>>, vector<1x128xf32>
    %7 = vector.broadcast %6 : vector<1x128xf32> to vector<16x128xf32>
    %8 = arith.mulf %5, %7 : vector<16x128xf32>
    %c0_7 = arith.constant 0 : index
    %c0_8 = arith.constant 0 : index
    %9 = vector.load %arg2[%c0_7, %c0_8] : memref<1x128xf32, #tpu.memory_space<vmem>>, vector<1x128xf32>
    %10 = vector.broadcast %9 : vector<1x128xf32> to vector<16x128xf32>
    %11 = arith.addf %8, %10 : vector<16x128xf32>
    %cst_9 = arith.constant 0.000000e+00 : f32
    %12 = vector.broadcast %cst_9 : f32 to vector<16x128xf32>
    %13 = arith.maximumf %11, %12 : vector<16x128xf32>
    %14 = arith.truncf %13 : vector<16x128xf32> to vector<16x128xbf16>
    %c1 = arith.constant 1 : index
    %c0_10 = arith.constant 0 : index
    %15 = vector.load %arg7[%c1, %c0_10] : memref<18x128xbf16, #tpu.memory_space<vmem>>, vector<16x128xbf16>
    tpu.vector_store %arg7[%c1, %c0_10], %14 {strides = array<i32>} : memref<18x128xbf16, #tpu.memory_space<vmem>>, vector<16x128xbf16>,
    %cst_11 = arith.constant 0.000000e+00 : f32
    %16 = vector.broadcast %cst_11 : f32 to vector<1x128xf32>
    %cst_12 = arith.constant 0.000000e+00 : f32
    %17 = vector.broadcast %cst_12 : f32 to vector<1x128xf32>
    %cst_13 = arith.constant 0.000000e+00 : f32
    %18 = vector.broadcast %cst_13 : f32 to vector<16x128xf32>
    %c0_14 = arith.constant 0 : index
    %c0_15 = arith.constant 0 : index
    %19 = vector.load %arg7[%c0_14, %c0_15] : memref<18x128xbf16, #tpu.memory_space<vmem>>, vector<16x128xbf16>
    %c0_16 = arith.constant 0 : index
    %c0_17 = arith.constant 0 : index
    %c0_18 = arith.constant 0 : index
    %20 = vector.load %arg4[%c0_16, %c0_17, %c0_18] : memref<3x128x128xbf16, #tpu.memory_space<vmem>>, vector<1x128x128xbf16>
    %21 = vector.shape_cast %20 : vector<1x128x128xbf16> to vector<128x128xbf16>
    %cst_19 = arith.constant dense<0.000000e+00> : vector<16x128xf32>
    %22 = tpu.matmul %19, %21, %cst_19 {dimension_numbers = #tpu.dot_dimension_numbers<[1], [0], [0], [1], [0, 0, 1, 1], [], []>} : vector<16x128xbf16>, vector<128x128xbf16>, vector<16x128xf32> -> vector<16x128xf32>
    %23 = arith.addf %18, %22 : vector<16x128xf32>
    %c1_20 = arith.constant 1 : index
    %c0_21 = arith.constant 0 : index
    %24 = vector.load %arg7[%c1_20, %c0_21] : memref<18x128xbf16, #tpu.memory_space<vmem>>, vector<16x128xbf16>
    %c1_22 = arith.constant 1 : index
    %c0_23 = arith.constant 0 : index
    %c0_24 = arith.constant 0 : index
    %25 = vector.load %arg4[%c1_22, %c0_23, %c0_24] : memref<3x128x128xbf16, #tpu.memory_space<vmem>>, vector<1x128x128xbf16>
    %26 = vector.shape_cast %25 : vector<1x128x128xbf16> to vector<128x128xbf16>
    %cst_25 = arith.constant dense<0.000000e+00> : vector<16x128xf32>
    %27 = tpu.matmul %24, %26, %cst_25 {dimension_numbers = #tpu.dot_dimension_numbers<[1], [0], [0], [1], [0, 0, 1, 1], [], []>} : vector<16x128xbf16>, vector<128x128xbf16>, vector<16x128xf32> -> vector<16x128xf32>
    %28 = arith.addf %23, %27 : vector<16x128xf32>
    %c2 = arith.constant 2 : index
    %c0_26 = arith.constant 0 : index
    %29 = vector.load %arg7[%c2, %c0_26] : memref<18x128xbf16, #tpu.memory_space<vmem>>, vector<16x128xbf16>
    %c2_27 = arith.constant 2 : index
    %c0_28 = arith.constant 0 : index
    %c0_29 = arith.constant 0 : index
    %30 = vector.load %arg4[%c2_27, %c0_28, %c0_29] : memref<3x128x128xbf16, #tpu.memory_space<vmem>>, vector<1x128x128xbf16>
    %31 = vector.shape_cast %30 : vector<1x128x128xbf16> to vector<128x128xbf16>
    %cst_30 = arith.constant dense<0.000000e+00> : vector<16x128xf32>
    %32 = tpu.matmul %29, %31, %cst_30 {dimension_numbers = #tpu.dot_dimension_numbers<[1], [0], [0], [1], [0, 0, 1, 1], [], []>} : vector<16x128xbf16>, vector<128x128xbf16>, vector<16x128xf32> -> vector<16x128xf32>
    %33 = arith.addf %28, %32 : vector<16x128xf32>
    %cst_31 = arith.constant dense<0.000000e+00> : vector<128xf32>
    %34 = vector.multi_reduction <add>, %33, %cst_31 [0] : vector<16x128xf32> to vector<128xf32>
    %35 = vector.shape_cast %34 : vector<128xf32> to vector<1x128xf32>
    %36 = arith.addf %16, %35 : vector<1x128xf32>
    %37 = arith.mulf %33, %33 : vector<16x128xf32>
    %cst_32 = arith.constant dense<0.000000e+00> : vector<128xf32>
    %38 = vector.multi_reduction <add>, %37, %cst_32 [0] : vector<16x128xf32> to vector<128xf32>
    %39 = vector.shape_cast %38 : vector<128xf32> to vector<1x128xf32>
    %40 = arith.addf %17, %39 : vector<1x128xf32>
    %41 = arith.truncf %33 : vector<16x128xf32> to vector<16x128xbf16>
    %c0_33 = arith.constant 0 : index
    %c0_34 = arith.constant 0 : index
    %c0_35 = arith.constant 0 : index
    %42 = vector.load %arg5[%c0_33, %c0_34, %c0_35] : memref<1x16x128xbf16, #tpu.memory_space<vmem>>, vector<1x16x128xbf16>
    %43 = vector.shape_cast %42 : vector<1x16x128xbf16> to vector<16x128xbf16>
    %44 = vector.shape_cast %41 : vector<16x128xbf16> to vector<1x16x128xbf16>
    tpu.vector_store %arg5[%c0_33, %c0_34, %c0_35], %44 {strides = array<i32>} : memref<1x16x128xbf16, #tpu.memory_space<vmem>>, vector<1x16x128xbf16>,
    %c0_36 = arith.constant 0 : index
    %c0_37 = arith.constant 0 : index
    %c0_38 = arith.constant 0 : index
    %45 = vector.load %arg6[%c0_36, %c0_37, %c0_38] : memref<1x2x128xf32, #tpu.memory_space<vmem>>, vector<1x1x128xf32>
    %46 = vector.shape_cast %45 : vector<1x1x128xf32> to vector<1x128xf32>
    %47 = vector.shape_cast %36 : vector<1x128xf32> to vector<1x1x128xf32>
    tpu.vector_store %arg6[%c0_36, %c0_37, %c0_38], %47 {strides = array<i32>} : memref<1x2x128xf32, #tpu.memory_space<vmem>>, vector<1x1x128xf32>,
    %c0_39 = arith.constant 0 : index
    %c1_40 = arith.constant 1 : index
    %c0_41 = arith.constant 0 : index
    %48 = vector.load %arg6[%c0_39, %c1_40, %c0_41] : memref<1x2x128xf32, #tpu.memory_space<vmem>>, vector<1x1x128xf32>
    %49 = vector.shape_cast %48 : vector<1x1x128xf32> to vector<1x128xf32>
    %50 = vector.shape_cast %40 : vector<1x128xf32> to vector<1x1x128xf32>
    tpu.vector_store %arg6[%c0_39, %c1_40, %c0_41], %50 {strides = array<i32>} : memref<1x2x128xf32, #tpu.memory_space<vmem>>, vector<1x1x128xf32>,
    return
  }
  func.func @transform_0(%arg0: i32) -> (i32, i32) {
    %c0_i32 = arith.constant 0 : i32
    %c0_i32_0 = arith.constant 0 : i32
    %c0_i32_1 = arith.constant 0 : i32
    return %c0_i32, %c0_i32_0 : i32, i32
  }
  func.func @transform_1(%arg0: i32) -> (i32, i32) {
    %c0_i32 = arith.constant 0 : i32
    %c0_i32_0 = arith.constant 0 : i32
    %c0_i32_1 = arith.constant 0 : i32
    return %c0_i32, %c0_i32_0 : i32, i32
  }
  func.func @transform_2(%arg0: i32) -> (i32, i32, i32) {
    %c0_i32 = arith.constant 0 : i32
    %c0_i32_0 = arith.constant 0 : i32
    %c0_i32_1 = arith.constant 0 : i32
    return %arg0, %c0_i32, %c0_i32_0 : i32, i32, i32
  }
  func.func @transform_3(%arg0: i32) -> (i32, i32, i32) {
    %c0_i32 = arith.constant 0 : i32
    %c0_i32_0 = arith.constant 0 : i32
    %c0_i32_1 = arith.constant 0 : i32
    %c0_i32_2 = arith.constant 0 : i32
    return %c0_i32, %c0_i32_0, %c0_i32_1 : i32, i32, i32
  }
  func.func @transform_4(%arg0: i32) -> (i32, i32, i32) {
    %c0_i32 = arith.constant 0 : i32
    %c0_i32_0 = arith.constant 0 : i32
    %c0_i32_1 = arith.constant 0 : i32
    return %arg0, %c0_i32, %c0_i32_0 : i32, i32, i32
  }
  func.func @transform_5(%arg0: i32) -> (i32, i32, i32) {
    %c0_i32 = arith.constant 0 : i32
    %c0_i32_0 = arith.constant 0 : i32
    %c0_i32_1 = arith.constant 0 : i32
    return %arg0, %c0_i32, %c0_i32_0 : i32, i32, i32
  }
}

module attributes {stable_mosaic.version = 11 : i64} {
  func.func @_bn_relu_kernel(%arg0: i32, %arg1: memref<1x128xf32, #tpu.memory_space<vmem>>, %arg2: memref<1x128xf32, #tpu.memory_space<vmem>>, %arg3: memref<1x16x128xbf16, #tpu.memory_space<vmem>>, %arg4: memref<1x16x128xf32, #tpu.memory_space<vmem>>) attributes {dimension_semantics = [#tpu.dimension_semantics<parallel>], iteration_bounds = array<i64: 2>, scalar_prefetch = 0 : i64, scratch_operands = 0 : i64, tpu.core_type = #tpu.core_type<tc>, window_params = [{pipeline_mode = #tpu.pipeline_mode<synchronous>, transform_indices = @transform_0, window_bounds = array<i64: 1, 128>}, {pipeline_mode = #tpu.pipeline_mode<synchronous>, transform_indices = @transform_1, window_bounds = array<i64: 1, 128>}, {transform_indices = @transform_2, window_bounds = array<i64: 1, 16, 128>}, {transform_indices = @transform_3, window_bounds = array<i64: 1, 16, 128>}]} {
    %c0 = arith.constant 0 : index
    %c0_0 = arith.constant 0 : index
    %c0_1 = arith.constant 0 : index
    %0 = vector.load %arg3[%c0, %c0_0, %c0_1] : memref<1x16x128xbf16, #tpu.memory_space<vmem>>, vector<1x16x128xbf16>
    %1 = vector.shape_cast %0 : vector<1x16x128xbf16> to vector<16x128xbf16>
    %2 = arith.extf %1 : vector<16x128xbf16> to vector<16x128xf32>
    %c0_2 = arith.constant 0 : index
    %c0_3 = arith.constant 0 : index
    %3 = vector.load %arg1[%c0_2, %c0_3] : memref<1x128xf32, #tpu.memory_space<vmem>>, vector<1x128xf32>
    %4 = vector.broadcast %3 : vector<1x128xf32> to vector<16x128xf32>
    %5 = arith.mulf %2, %4 : vector<16x128xf32>
    %c0_4 = arith.constant 0 : index
    %c0_5 = arith.constant 0 : index
    %6 = vector.load %arg2[%c0_4, %c0_5] : memref<1x128xf32, #tpu.memory_space<vmem>>, vector<1x128xf32>
    %7 = vector.broadcast %6 : vector<1x128xf32> to vector<16x128xf32>
    %8 = arith.addf %5, %7 : vector<16x128xf32>
    %cst = arith.constant 0.000000e+00 : f32
    %9 = vector.broadcast %cst : f32 to vector<16x128xf32>
    %10 = arith.maximumf %8, %9 : vector<16x128xf32>
    %c0_6 = arith.constant 0 : index
    %c0_7 = arith.constant 0 : index
    %c0_8 = arith.constant 0 : index
    %11 = vector.load %arg4[%c0_6, %c0_7, %c0_8] : memref<1x16x128xf32, #tpu.memory_space<vmem>>, vector<1x16x128xf32>
    %12 = vector.shape_cast %11 : vector<1x16x128xf32> to vector<16x128xf32>
    %13 = vector.shape_cast %10 : vector<16x128xf32> to vector<1x16x128xf32>
    tpu.vector_store %arg4[%c0_6, %c0_7, %c0_8], %13 {strides = array<i32>} : memref<1x16x128xf32, #tpu.memory_space<vmem>>, vector<1x16x128xf32>,
    return
  }
  func.func @transform_0(%arg0: i32) -> (i32, i32) {
    %c0_i32 = arith.constant 0 : i32
    %c0_i32_0 = arith.constant 0 : i32
    %c0_i32_1 = arith.constant 0 : i32
    return %c0_i32, %c0_i32_0 : i32, i32
  }
  func.func @transform_1(%arg0: i32) -> (i32, i32) {
    %c0_i32 = arith.constant 0 : i32
    %c0_i32_0 = arith.constant 0 : i32
    %c0_i32_1 = arith.constant 0 : i32
    return %c0_i32, %c0_i32_0 : i32, i32
  }
  func.func @transform_2(%arg0: i32) -> (i32, i32, i32) {
    %c0_i32 = arith.constant 0 : i32
    %c0_i32_0 = arith.constant 0 : i32
    %c0_i32_1 = arith.constant 0 : i32
    return %arg0, %c0_i32, %c0_i32_0 : i32, i32, i32
  }
  func.func @transform_3(%arg0: i32) -> (i32, i32, i32) {
    %c0_i32 = arith.constant 0 : i32
    %c0_i32_0 = arith.constant 0 : i32
    %c0_i32_1 = arith.constant 0 : i32
    return %arg0, %c0_i32, %c0_i32_0 : i32, i32, i32
  }
}

</mosaic_0001>

<llo_original>
// kernel: tile.28
$region0: #{tile.28}
  #allocation0 [shape = 's32[1]{0}', space=sflag, size = 0x4, scoped, tag = 'scoped memory for tile.28']
  %s0 = inlined_call_operand.vmem [shape: f32[8], index: 0, kind: input, shape index: {}]
  %s1 = inlined_call_operand.vmem [shape: f32[16,8], index: 1, kind: output, shape index: {}]
  // Predicated region
  $region2: #{tile.28} parent=0 // pred_check
    _
  $region3: #{tile.28} parent=0 // pred_check_branch
    %3 = sbr.rel (0) target = $region5
  $region4: #{tile.28} parent=0 // pred_region
    _
  $region5: #{tile.28} parent=0 // pred_fallthru
    _
  %v4 = vld [vmem:[%s0] ss:$0 sm:$0xff]
  %5 = vst [vmem:[%s1] sm:$0xff] %v4
  %s6 = scalar_lea.vmem %s1, 8
  %7 = vst [vmem:[%s6] sm:$0xff] %v4

// kernel: tile.29
$region0: #{tile.29}
  %s0 = inlined_call_operand.vmem [shape: f32[16,8], index: 0, kind: input, shape index: {}]
  %s1 = inlined_call_operand.vmem [shape: f32[1,128], index: 1, kind: output, shape index: {}]
  $region1: #{tile.29} parent=0
    #allocation0 [shape = 'u8[4096]{0}', space=vmem, size = 0x1000, scoped, tag = 'scoped mem for output reshape']
    %v2 = vld [vmem:[%s0] sm:$0x1]
    %vm3 = vcmask 64512
    %4 = vst.msk [vmem:[#allocation0] sm:$0x1] %vm3, %v2
    %s5 = scalar_lea.vmem %s0, 15
    %v6 = vld [vmem:[%s5] sm:$0x1]
    %7 = vrot.lane.b32.xlu0 %v6, 120
    %v8 = vpop.permute.xlu0 %7
    %vm9 = vcmask 1048512
    %10 = vst.msk [vmem:[#allocation0] sm:$0x1] %vm9, %v8
    %s11 = scalar_lea.vmem %s0, 14
    %v12 = vld [vmem:[%s11] sm:$0x1]
    %13 = vrot.lane.b32.xlu0 %v12, 112
    %v14 = vpop.permute.xlu0 %13
    %vm15 = vcmask 982912
    %16 = vst.msk [vmem:[#allocation0] sm:$0x1] %vm15, %v14
    %s17 = scalar_lea.vmem %s0, 13
    %v18 = vld [vmem:[%s17] sm:$0x1]
    %19 = vrot.lane.b32.xlu0 %v18, 104
    %v20 = vpop.permute.xlu0 %19
    %vm21 = vcmask 917312
    %22 = vst.msk [vmem:[#allocation0] sm:$0x1] %vm21, %v20
    %s23 = scalar_lea.vmem %s0, 12
    %v24 = vld [vmem:[%s23] sm:$0x1]
    %25 = vrot.lane.b32.xlu0 %v24, 96
    %v26 = vpop.permute.xlu0 %25
    %vm27 = vcmask 851712
    %28 = vst.msk [vmem:[#allocation0] sm:$0x1] %vm27, %v26
    %s29 = scalar_lea.vmem %s0, 11
    %v30 = vld [vmem:[%s29] sm:$0x1]
    %31 = vrot.lane.b32.xlu0 %v30, 88
    %v32 = vpop.permute.xlu0 %31
    %vm33 = vcmask 786112
    %34 = vst.msk [vmem:[#allocation0] sm:$0x1] %vm33, %v32
    %s35 = scalar_lea.vmem %s0, 10
    %v36 = vld [vmem:[%s35] sm:$0x1]
    %37 = vrot.lane.b32.xlu0 %v36, 80
    %v38 = vpop.permute.xlu0 %37
    %vm39 = vcmask 720512
    %40 = vst.msk [vmem:[#allocation0] sm:$0x1] %vm39, %v38
    %s41 = scalar_lea.vmem %s0, 9
    %v42 = vld [vmem:[%s41] sm:$0x1]
    %43 = vrot.lane.b32.xlu0 %v42, 72
    %v44 = vpop.permute.xlu0 %43
    %vm45 = vcmask 654912
    %46 = vst.msk [vmem:[#allocation0] sm:$0x1] %vm45, %v44
    %s47 = scalar_lea.vmem %s0, 8
    %v48 = vld [vmem:[%s47] sm:$0x1]
    %49 = vrot.lane.b32.xlu0 %v48, 64
    %v50 = vpop.permute.xlu0 %49
    %vm51 = vcmask 589312
    %52 = vst.msk [vmem:[#allocation0] sm:$0x1] %vm51, %v50
    %s53 = scalar_lea.vmem %s0, 7
    %v54 = vld [vmem:[%s53] sm:$0x1]
    %55 = vrot.lane.b32.xlu0 %v54, 56
    %v56 = vpop.permute.xlu0 %55
    %vm57 = vcmask 523712
    %58 = vst.msk [vmem:[#allocation0] sm:$0x1] %vm57, %v56
    %s59 = scalar_lea.vmem %s0, 6
    %v60 = vld [vmem:[%s59] sm:$0x1]
    %61 = vrot.lane.b32.xlu0 %v60, 48
    %v62 = vpop.permute.xlu0 %61
    %vm63 = vcmask 458112
    %64 = vst.msk [vmem:[#allocation0] sm:$0x1] %vm63, %v62
    %s65 = scalar_lea.vmem %s0, 5
    %v66 = vld [vmem:[%s65] sm:$0x1]
    %67 = vrot.lane.b32.xlu0 %v66, 40
    %v68 = vpop.permute.xlu0 %67
    %vm69 = vcmask 392512
    %70 = vst.msk [vmem:[#allocation0] sm:$0x1] %vm69, %v68
    %s71 = scalar_lea.vmem %s0, 4
    %v72 = vld [vmem:[%s71] sm:$0x1]
    %73 = vrot.lane.b32.xlu0 %v72, 32
    %v74 = vpop.permute.xlu0 %73
    %vm75 = vcmask 326912
    %76 = vst.msk [vmem:[#allocation0] sm:$0x1] %vm75, %v74
    %s77 = scalar_lea.vmem %s0, 3
    %v78 = vld [vmem:[%s77] sm:$0x1]
    %79 = vrot.lane.b32.xlu0 %v78, 24
    %v80 = vpop.permute.xlu0 %79
    %vm81 = vcmask 261312
    %82 = vst.msk [vmem:[#allocation0] sm:$0x1] %vm81, %v80
    %s83 = scalar_lea.vmem %s0, 2
    %v84 = vld [vmem:[%s83] sm:$0x1]
    %85 = vrot.lane.b32.xlu0 %v84, 16
    %v86 = vpop.permute.xlu0 %85
    %vm87 = vcmask 195712
    %88 = vst.msk [vmem:[#allocation0] sm:$0x1] %vm87, %v86
    %s89 = scalar_lea.vmem %s0, 1
    %v90 = vld [vmem:[%s89] sm:$0x1]
    %91 = vrot.lane.b32.xlu0 %v90, 8
    %v92 = vpop.permute.xlu0 %91
    %vm93 = vcmask 130112
    %94 = vst.msk [vmem:[#allocation0] sm:$0x1] %vm93, %v92
    %s96 = sshll.u32 1, 1
    %s97 = ssub.s32 %s96, 1
    %v99 = vld [vmem:[#allocation0] sm:%s97]
    %s100 = sshll.u32 1, 1
    %s101 = ssub.s32 %s100, 1
    %102 = vst [vmem:[%s1] sm:%s101] %v99

// kernel: conv_conv_forward.3
$region0: #{conv_conv_forward.3}
  #allocation0 [shape = 'u32[]', space=smem, size = 0x4, offset = 0x4, fixed_abs, tag = 'smem constant byte address 0x4 - core index']
  #allocation1 [shape = 'u32[144,128]{1,0:T(1,128)}', space=vmem, size = 0x12000, scoped, tag = 'internal scratch']
  #allocation2 [shape = 'bf16[18,64]{1,0:T(8,128)(2,1)}', space=vmem, size = 0x1800, scoped, tag = 'scratch operand']
  %s0 = inlined_call_operand.vmem [shape: bf16[2,16,64], index: 0, kind: input, shape index: {}]
  %s1 = inlined_call_operand.vmem [shape: bf16[3,64,128], index: 1, kind: input, shape index: {}]
  %s2 = inlined_call_operand.vmem [shape: bf16[2,16,128], index: 2, kind: output, shape index: {0}]
  %s3 = inlined_call_operand.vmem [shape: f32[2,2,128], index: 3, kind: output, shape index: {1}]
  %4 = xla_tuple %s2, %s3
  %s5 = sld [smem:[#allocation0]]
  $region49: #{conv_conv_forward.3} parent=0
    _
  %s7 = ssub.s32 1, %s5
  %s8 = scalar_select 0, %s7, %s5
  loop: start=0, step=1, limit=4
  $region2: #{conv_conv_forward.3} parent=0 // loop_pre_header
    _
  $region3: #{conv_conv_forward.3} parent=0 // loop_header
    %s10 = sphi 0, %s14
    %p11 = scmp.ge.s32.totalorder %s10, 4
    %s20 = sphi 0, %s22
    %s23 = sphi 0, %s20
    %s24 = sphi 0, %s23
    %s40 = sphi 0, %s24
    %s44 = sphi 0, %s44
    %s46 = sphi 0, %s44
    %s47 = sphi 0, %s46
    %s61 = sphi 0, %s47
    %s67 = sphi 0, %s69
    %s70 = sphi 0, %s67
    %s71 = sphi 0, %s70
    %s87 = sphi 0, %s71
    %s93 = sphi 0, %s95
    %s96 = sphi 0, %s93
    %s97 = sphi 0, %s96
    %s113 = sphi 0, %s97
  $region4: #{conv_conv_forward.3} parent=0 // loop_header_branch
    %13 = sbr.rel (%p11) target = $region8
  $region5: #{conv_conv_forward.3} parent=0 // loop_body
    %s15 = ssub.s32 %s10, 1
    %s16 = ssub.s32 %s10, 2
    %s17 = sadd.s32 %s10, 1
    %s18 = ssub.s32 %s10, %s17
    %p19 = scmp.eq.s32.totalorder %s18, 0
    %s21 = sadd.s32 %s20, 1
    %s22 = scalar_select %p19, %s20, %s21
    %p25 = pneg %p19
    %p26 = scmp.eq.s32.totalorder %s10, 1
    %p27 = por %p25, %p26
    %p28 = scmp.ne.s32.totalorder %s20, %s23
    %p29 = scmp.eq.s32.totalorder %s10, 0
    %p30 = por %p28, %p29
    %p31 = scmp.ne.s32.totalorder %s20, %s23
    %p32 = scmp.eq.s32.totalorder %s15, 1
    %p33 = por %p31, %p32
    %p34 = scmp.ne.s32.totalorder %s23, %s24
    %p35 = scmp.eq.s32.totalorder %s15, 0
    %p36 = por %p34, %p35
    %p37 = scmp.ne.s32.totalorder %s23, %s24
    %p38 = scmp.eq.s32.totalorder %s16, 1
    %p39 = por %p37, %p38
    %p41 = scmp.ne.s32.totalorder %s24, %s40
    %p42 = scmp.eq.s32.totalorder %s16, 0
    %p43 = por %p41, %p42
    %s45 = sadd.s32 %s44, 1
    %p48 = scmp.eq.s32.totalorder %s10, 1
    %p49 = scmp.ne.s32.totalorder %s44, %s46
    %p50 = scmp.eq.s32.totalorder %s10, 0
    %p51 = por %p49, %p50
    %p52 = scmp.ne.s32.totalorder %s44, %s46
    %p53 = scmp.eq.s32.totalorder %s15, 1
    %p54 = por %p52, %p53
    %p55 = scmp.ne.s32.totalorder %s46, %s47
    %p56 = scmp.eq.s32.totalorder %s15, 0
    %p57 = por %p55, %p56
    %p58 = scmp.ne.s32.totalorder %s46, %s47
    %p59 = scmp.eq.s32.totalorder %s16, 1
    %p60 = por %p58, %p59
    %p62 = scmp.ne.s32.totalorder %s47, %s61
    %p63 = scmp.eq.s32.totalorder %s16, 0
    %p64 = por %p62, %p63
    %s65 = ssub.s32 %s10, %s17
    %p66 = scmp.eq.s32.totalorder %s65, 0
    %s68 = sadd.s32 %s67, 1
    %s69 = scalar_select %p66, %s67, %s68
    %p72 = pneg %p66
    %p73 = scmp.eq.s32.totalorder %s10, 1
    %p74 = por %p72, %p73
    %p75 = scmp.ne.s32.totalorder %s67, %s70
    %p76 = scmp.eq.s32.totalorder %s10, 0
    %p77 = por %p75, %p76
    %p78 = scmp.ne.s32.totalorder %s67, %s70
    %p79 = scmp.eq.s32.totalorder %s15, 1
    %p80 = por %p78, %p79
    %p81 = scmp.ne.s32.totalorder %s70, %s71
    %p82 = scmp.eq.s32.totalorder %s15, 0
    %p83 = por %p81, %p82
    %p84 = scmp.ne.s32.totalorder %s70, %s71
    %p85 = scmp.eq.s32.totalorder %s16, 1
    %p86 = por %p84, %p85
    %p88 = scmp.ne.s32.totalorder %s71, %s87
    %p89 = scmp.eq.s32.totalorder %s16, 0
    %p90 = por %p88, %p89
    %s91 = ssub.s32 %s10, %s17
    %p92 = scmp.eq.s32.totalorder %s91, 0
    %s94 = sadd.s32 %s93, 1
    %s95 = scalar_select %p92, %s93, %s94
    %p98 = pneg %p92
    %p99 = scmp.eq.s32.totalorder %s10, 1
    %p100 = por %p98, %p99
    %p101 = scmp.ne.s32.totalorder %s93, %s96
    %p102 = scmp.eq.s32.totalorder %s10, 0
    %p103 = por %p101, %p102
    %p104 = scmp.ne.s32.totalorder %s93, %s96
    %p105 = scmp.eq.s32.totalorder %s15, 1
    %p106 = por %p104, %p105
    %p107 = scmp.ne.s32.totalorder %s96, %s97
    %p108 = scmp.eq.s32.totalorder %s15, 0
    %p109 = por %p107, %p108
    %p110 = scmp.ne.s32.totalorder %s96, %s97
    %p111 = scmp.eq.s32.totalorder %s16, 1
    %p112 = por %p110, %p111
    %p114 = scmp.ne.s32.totalorder %s97, %s113
    %p115 = scmp.eq.s32.totalorder %s16, 0
    %p116 = por %p114, %p115
    %p117 = scmp.le.s32.totalorder 1, %s10
    %p118 = scmp.lt.s32.totalorder %s10, 3
    %p119 = pnand %p117, %p118
    %p120 = pneg %p119
    // Predicated region
    $region9: #{conv_conv_forward.3} parent=5 // pred_check
      _
    $region10: #{conv_conv_forward.3} parent=5 // pred_check_branch
      %122 = sbr.rel (%p119) target = $region12
    $region11: #{conv_conv_forward.3} parent=5 // pred_region
      %s123 = ssub.s32 %s10, 1
      // Predicated region
      $region13: #{conv_conv_forward.3} parent=11 // pred_check
        %p124 = pneg %p57
      $region14: #{conv_conv_forward.3} parent=11 // pred_check_branch
        %126 = sbr.rel (%p124) target = $region16
      $region15: #{conv_conv_forward.3} parent=11 // pred_region
        _
      $region16: #{conv_conv_forward.3} parent=11 // pred_fallthru
        _
    $region12: #{conv_conv_forward.3} parent=5 // pred_fallthru
      _
    %p127 = scmp.lt.s32.totalorder %s10, 2
    // Predicated region
    $region17: #{conv_conv_forward.3} parent=5 // pred_check
      %p128 = pneg %p127
    $region18: #{conv_conv_forward.3} parent=5 // pred_check_branch
      %130 = sbr.rel (%p128) target = $region20
    $region19: #{conv_conv_forward.3} parent=5 // pred_region
      // Predicated region
      $region21: #{conv_conv_forward.3} parent=19 // pred_check
        %p131 = pneg %p30
      $region22: #{conv_conv_forward.3} parent=19 // pred_check_branch
        %133 = sbr.rel (%p131) target = $region24
      $region23: #{conv_conv_forward.3} parent=19 // pred_region
        %p134 = scmp.lt.s32.totalorder %s10, 1
        %s135 = scalar_select %p134, %s10, 1
        %s136 = smul.addr %s135, 2
        %s137 = smul.addr %s136, 4
        %s138 = scalar_lea.vmem %s0, %s137
      $region24: #{conv_conv_forward.3} parent=19 // pred_fallthru
        _
    $region20: #{conv_conv_forward.3} parent=5 // pred_fallthru
      _
    %p139 = scmp.le.s32.totalorder 1, %s10
    %p140 = scmp.lt.s32.totalorder %s10, 3
    %p141 = pnand %p139, %p140
    %p142 = pneg %p141
    // Predicated region
    $region25: #{conv_conv_forward.3} parent=5 // pred_check
      _
    $region26: #{conv_conv_forward.3} parent=5 // pred_check_branch
      %144 = sbr.rel (%p141) target = $region28
    $region27: #{conv_conv_forward.3} parent=5 // pred_region
      %s145 = ssub.s32 %s10, 1
      %p146 = scmp.lt.s32.totalorder %s15, 1
      %s147 = scalar_select %p146, %s15, 1
      %s148 = smul.addr %s147, 2
      %s149 = smul.addr %s148, 4
      %s150 = scalar_lea.vmem %s0, %s149
      %p151 = pneg %p36
      %p152 = pneg %p33
      %p153 = pneg %p57
      %p154 = pneg %p54
      %p155 = pneg %p83
      %p156 = pneg %p80
      %p157 = scmp.lt.s32.totalorder %s15, 1
      %s158 = scalar_select %p157, %s15, 1
      %s159 = smul.addr %s158, 2
      %s160 = smul.addr %s159, 4
      %s161 = scalar_lea.vmem %s2, %s160
      %p162 = pneg %p109
      %p163 = pneg %p106
      %p164 = scmp.lt.s32.totalorder %s15, 1
      %s165 = scalar_select %p164, %s15, 1
      %s166 = smul.addr %s165, 2
      %s167 = scalar_lea.vmem %s3, %s166
      %p168 = scmp.lt.s32.totalorder %s15, 1
      %s169 = scalar_select %p168, %s15, 1
      %s170 = smul.addr %s169, 2
      %s171 = smul.addr %s170, 4
      %s172 = scalar_lea.vmem %s0, %s171
      %p173 = scmp.lt.s32.totalorder %s15, 1
      %s174 = scalar_select %p173, %s15, 1
      %s175 = smul.addr %s174, 2
      %s176 = smul.addr %s175, 4
      %s177 = scalar_lea.vmem %s2, %s176
      %p178 = scmp.lt.s32.totalorder %s15, 1
      %s179 = scalar_select %p178, %s15, 1
      %s180 = smul.addr %s179, 2
      %s181 = scalar_lea.vmem %s3, %s180
      %vm183 = vcmask 516096
      %vm184 = vsmask.f32 256
      %vm185 = vmand %vm183, %vm184
      %v186 = vld [vmem:[#allocation2] sm:$0x1]
      %v187 = vsel %vm185, 0, %v186
      %188 = vst [vmem:[#allocation2] sm:$0x1] %v187
      %vm189 = vsmask.f32 7938
      %vm190 = vmand %vm183, %vm189
      %v191 = vld [vmem:[#allocation2 + $0x8] sm:$0x1]
      %v192 = vsel %vm190, 0, %v191
      %193 = vst [vmem:[#allocation2 + $0x8] sm:$0x1] %v192
      %v194 = vld [vmem:[%s172] sm:$0xf]
      %v195 = vld [vmem:[%s172 + $0x4] sm:$0xf]
      %vm196 = vsmask.f32 4368
      %vm197 = vmor %vm184, %vm196
      %v199 = vshrl.u32 %v194, 16
      %v201 = vrot.slane %v199, 7
      %v202 = vshll.u32 %v194, 16
      %v204 = vor.u32 %v201, %v202
      %v205 = vrot.slane %v201, 4
      %v207 = vshrl.u32 %v195, 16
      %v209 = vrot.slane %v207, 7
      %v210 = vshll.u32 %v195, 16
      %v212 = vor.u32 %v209, %v210
      %v213 = vsel %vm197, %v205, %v212
      %v214 = vrot.slane %v209, 4
      %vm218 = vcmask 519168
      %vm219 = vmand %vm218, %vm189
      %v220 = vld [vmem:[#allocation2] sm:$0xf]
      %v221 = vsel %vm219, %v204, %v220
      %222 = vst [vmem:[#allocation2] sm:$0xf] %v221
      %vm223 = vcmask 519168
      %224 = vst.msk [vmem:[#allocation2 + $0x4] sm:$0xf] %vm223, %v213
      %v225 = vld [vmem:[#allocation2 + $0x8] sm:$0x1]
      %v226 = vsel %vm185, %v214, %v225
      %227 = vst [vmem:[#allocation2 + $0x8] sm:$0x1] %v226
      %v228 = vld [vmem:[#allocation2] sm:$0xf]
      %v229 = vld [vmem:[#allocation2 + $0x4] sm:$0xf]
      %v230 = vld [vmem:[%s1] sm:$0xf]
      %v231 = vld [vmem:[%s1 + $0x4] sm:$0xf]
      %v232 = vld [vmem:[%s1 + $0x8] sm:$0xf]
      %v233 = vld [vmem:[%s1 + $0xc] sm:$0xf]
      %v234 = vld [vmem:[%s1 + $0x10] sm:$0xf]
      %v235 = vld [vmem:[%s1 + $0x14] sm:$0xf]
      %v236 = vld [vmem:[%s1 + $0x18] sm:$0xf]
      %v237 = vld [vmem:[%s1 + $0x1c] sm:$0xf]
      %v238 = vld [vmem:[#allocation2 + $0x8] sm:$0x1]
      %s239 = scalar_lea.vmem %s1, 32
      %v240 = vld [vmem:[%s239] sm:$0xf]
      %v241 = vld [vmem:[%s239 + $0x4] sm:$0xf]
      %v242 = vld [vmem:[%s239 + $0x8] sm:$0xf]
      %v243 = vld [vmem:[%s239 + $0xc] sm:$0xf]
      %v244 = vld [vmem:[%s239 + $0x10] sm:$0xf]
      %v245 = vld [vmem:[%s239 + $0x14] sm:$0xf]
      %v246 = vld [vmem:[%s239 + $0x18] sm:$0xf]
      %v247 = vld [vmem:[%s239 + $0x1c] sm:$0xf]
      %v251 = vunpack.c.l.b16 %v228
      %v252 = vunpack.c.l.b16 %v229
      %v253 = vunpack.c.l.b16 %v238
      %v254 = vpack.c.b16 %v252, %v251
      %v255 = vpack.c.b16 %v253, %v253
      %vm256 = vsmask.f32 7424
      %v258 = vshrl.u32 %v254, 16
      %v260 = vshll.u32 %v254, 16
      %v262 = vrot.slane %v260, 1
      %v263 = vor.u32 %v258, %v262
      %v265 = vshll.u32 %v255, 16
      %v267 = vrot.slane %v265, 1
      %v268 = vsel %vm256, %v263, %v267
      %v277 = vunpack.c.l.b16 %v240
      %v278 = vunpack.c.l.b16 %v241
      %v279 = vunpack.c.l.b16 %v242
      %v280 = vunpack.c.l.b16 %v243
      %v281 = vunpack.c.l.b16 %v244
      %v282 = vunpack.c.l.b16 %v245
      %v283 = vunpack.c.l.b16 %v246
      %v284 = vunpack.c.l.b16 %v247
      %v285 = vpack.c.b16 %v278, %v277
      %v286 = vpack.c.b16 %v280, %v279
      %v287 = vpack.c.b16 %v282, %v281
      %v288 = vpack.c.b16 %v284, %v283
      %vm293 = vcmask 523264
      %v295 = vsel %vm293, %v268, 0
      %297 = vmatprep.subr.bf16.mxu0 0
      %298 = vmatpush1.bf16.msra.mxu0 0
      %299 = vmatprep.subr.bf16.mxu0 0
      %300 = vmatpush1.bf16.msra.mxu0 0
      %301 = vmatprep.subr.bf16.mxu0 0
      %302 = vmatpush1.bf16.msra.mxu0 0
      %303 = vmatprep.subr.bf16.mxu0 0
      %304 = vmatpush1.bf16.msra.mxu0 0
      %305 = vmatprep.subr.bf16.mxu0 0
      %306 = vmatpush1.bf16.msra.mxu0 %v288
      %307 = vmatprep.subr.bf16.mxu0 0
      %308 = vmatpush1.bf16.msra.mxu0 %v287
      %309 = vmatprep.subr.bf16.mxu0 0
      %310 = vmatpush1.bf16.msra.mxu0 %v286
      %311 = vmatprep.subr.bf16.mxu0 0
      %312 = vmatpush1.bf16.msra.mxu0 %v285
      %313 = vmatprep.subr.bf16.mxu0 0
      %314 = vmatpush2.bf16.msra.mxu0 0
      %315 = vmatprep.subr.bf16.mxu0 0
      %316 = vmatpush2.bf16.msra.mxu0 0
      %317 = vmatprep.subr.bf16.mxu0 0
      %318 = vmatpush2.bf16.msra.mxu0 0
      %319 = vmatprep.subr.bf16.mxu0 0
      %320 = vmatpush2.bf16.msra.mxu0 0
      %321 = vmatprep.subr.bf16.mxu0 0
      %322 = vmatpush2.bf16.msra.mxu0 0
      %323 = vmatprep.subr.bf16.mxu0 0
      %324 = vmatpush2.bf16.msra.mxu0 0
      %325 = vmatprep.subr.bf16.mxu0 0
      %326 = vmatpush2.bf16.msra.mxu0 0
      %327 = vmatprep.subr.bf16.mxu0 0
      %328 = vmatpush2.bf16.msra.mxu0 0
      %329 = vmatprep.mubr.bf16.mxu0 0
      %330 = vmatmul.mubr.bf16.gmra.mxu0 %v295
      %v331 = vpop.f32.mrf.mxu0
      %v332 = vadd.f32 0.0, %v331
      %v333 = vpop.f32.mrf.mxu0
      %v334 = vpop.f32.mrf.mxu0
      %v335 = vadd.f32 0.0, %v334
      %v336 = vpop.f32.mrf.mxu0
      %337 = vdwg.mxu0
      %v346 = vunpack.c.l.b16 %v230
      %v347 = vunpack.c.l.b16 %v231
      %v348 = vunpack.c.l.b16 %v232
      %v349 = vunpack.c.l.b16 %v233
      %v350 = vunpack.c.l.b16 %v234
      %v351 = vunpack.c.l.b16 %v235
      %v352 = vunpack.c.l.b16 %v236
      %v353 = vunpack.c.l.b16 %v237
      %v354 = vpack.c.b16 %v347, %v346
      %v355 = vpack.c.b16 %v349, %v348
      %v356 = vpack.c.b16 %v351, %v350
      %v357 = vpack.c.b16 %v353, %v352
      %v362 = vsel %vm293, %v254, 0
      %364 = vmatprep.subr.bf16.mxu0 0
      %365 = vmatpush1.bf16.msra.mxu0 0
      %366 = vmatprep.subr.bf16.mxu0 0
      %367 = vmatpush1.bf16.msra.mxu0 0
      %368 = vmatprep.subr.bf16.mxu0 0
      %369 = vmatpush1.bf16.msra.mxu0 0
      %370 = vmatprep.subr.bf16.mxu0 0
      %371 = vmatpush1.bf16.msra.mxu0 0
      %372 = vmatprep.subr.bf16.mxu0 0
      %373 = vmatpush1.bf16.msra.mxu0 %v357
      %374 = vmatprep.subr.bf16.mxu0 0
      %375 = vmatpush1.bf16.msra.mxu0 %v356
      %376 = vmatprep.subr.bf16.mxu0 0
      %377 = vmatpush1.bf16.msra.mxu0 %v355
      %378 = vmatprep.subr.bf16.mxu0 0
      %379 = vmatpush1.bf16.msra.mxu0 %v354
      %380 = vmatprep.subr.bf16.mxu0 0
      %381 = vmatpush2.bf16.msra.mxu0 0
      %382 = vmatprep.subr.bf16.mxu0 0
      %383 = vmatpush2.bf16.msra.mxu0 0
      %384 = vmatprep.subr.bf16.mxu0 0
      %385 = vmatpush2.bf16.msra.mxu0 0
      %386 = vmatprep.subr.bf16.mxu0 0
      %387 = vmatpush2.bf16.msra.mxu0 0
      %388 = vmatprep.subr.bf16.mxu0 0
      %389 = vmatpush2.bf16.msra.mxu0 0
      %390 = vmatprep.subr.bf16.mxu0 0
      %391 = vmatpush2.bf16.msra.mxu0 0
      %392 = vmatprep.subr.bf16.mxu0 0
      %393 = vmatpush2.bf16.msra.mxu0 0
      %394 = vmatprep.subr.bf16.mxu0 0
      %395 = vmatpush2.bf16.msra.mxu0 0
      %396 = vmatprep.mubr.bf16.mxu0 0
      %397 = vmatmul.mubr.bf16.gmra.mxu0 %v362
      %v398 = vpop.f32.mrf.mxu0
      %v399 = vadd.f32 %v332, %v398
      %v400 = vpop.f32.mrf.mxu0
      %v401 = vpop.f32.mrf.mxu0
      %v402 = vadd.f32 %v335, %v401
      %v403 = vpop.f32.mrf.mxu0
      %404 = vdwg.mxu0
      %v405 = vld [vmem:[#allocation2] sm:$0xe]
      %s406 = scalar_lea.vmem %s1, 64
      %v407 = vld [vmem:[%s406] sm:$0xf]
      %v408 = vld [vmem:[%s406 + $0x4] sm:$0xf]
      %v409 = vld [vmem:[%s406 + $0x8] sm:$0xf]
      %v410 = vld [vmem:[%s406 + $0xc] sm:$0xf]
      %v411 = vld [vmem:[%s406 + $0x10] sm:$0xf]
      %v412 = vld [vmem:[%s406 + $0x14] sm:$0xf]
      %v413 = vld [vmem:[%s406 + $0x18] sm:$0xf]
      %v414 = vld [vmem:[%s406 + $0x1c] sm:$0xf]
      %v416 = vunpack.c.l.b16 %v405
      %v417 = vpack.c.b16 %v252, %v416
      %vm418 = vcmask 1046528
      %v419 = vrot.slane %v417, 1
      %v420 = vrot.slane %v255, 1
      %v421 = vsel %vm418, %v419, %v420
      %v430 = vunpack.c.l.b16 %v407
      %v431 = vunpack.c.l.b16 %v408
      %v432 = vunpack.c.l.b16 %v409
      %v433 = vunpack.c.l.b16 %v410
      %v434 = vunpack.c.l.b16 %v411
      %v435 = vunpack.c.l.b16 %v412
      %v436 = vunpack.c.l.b16 %v413
      %v437 = vunpack.c.l.b16 %v414
      %v438 = vpack.c.b16 %v431, %v430
      %v439 = vpack.c.b16 %v433, %v432
      %v440 = vpack.c.b16 %v435, %v434
      %v441 = vpack.c.b16 %v437, %v436
      %v447 = vsel %vm293, %v421, 0
      %449 = vmatprep.subr.bf16.mxu0 0
      %450 = vmatpush1.bf16.msra.mxu0 0
      %451 = vmatprep.subr.bf16.mxu0 0
      %452 = vmatpush1.bf16.msra.mxu0 0
      %453 = vmatprep.subr.bf16.mxu0 0
      %454 = vmatpush1.bf16.msra.mxu0 0
      %455 = vmatprep.subr.bf16.mxu0 0
      %456 = vmatpush1.bf16.msra.mxu0 0
      %457 = vmatprep.subr.bf16.mxu0 0
      %458 = vmatpush1.bf16.msra.mxu0 %v441
      %459 = vmatprep.subr.bf16.mxu0 0
      %460 = vmatpush1.bf16.msra.mxu0 %v440
      %461 = vmatprep.subr.bf16.mxu0 0
      %462 = vmatpush1.bf16.msra.mxu0 %v439
      %463 = vmatprep.subr.bf16.mxu0 0
      %464 = vmatpush1.bf16.msra.mxu0 %v438
      %465 = vmatprep.subr.bf16.mxu0 0
      %466 = vmatpush2.bf16.msra.mxu0 0
      %467 = vmatprep.subr.bf16.mxu0 0
      %468 = vmatpush2.bf16.msra.mxu0 0
      %469 = vmatprep.subr.bf16.mxu0 0
      %470 = vmatpush2.bf16.msra.mxu0 0
      %471 = vmatprep.subr.bf16.mxu0 0
      %472 = vmatpush2.bf16.msra.mxu0 0
      %473 = vmatprep.subr.bf16.mxu0 0
      %474 = vmatpush2.bf16.msra.mxu0 0
      %475 = vmatprep.subr.bf16.mxu0 0
      %476 = vmatpush2.bf16.msra.mxu0 0
      %477 = vmatprep.subr.bf16.mxu0 0
      %478 = vmatpush2.bf16.msra.mxu0 0
      %479 = vmatprep.subr.bf16.mxu0 0
      %480 = vmatpush2.bf16.msra.mxu0 0
      %481 = vmatprep.mubr.bf16.mxu0 0
      %482 = vmatmul.mubr.bf16.gmra.mxu0 %v447
      %v483 = vpop.f32.mrf.mxu0
      %v484 = vadd.f32 0.0, %v483
      %v485 = vpop.f32.mrf.mxu0
      %v486 = vpop.f32.mrf.mxu0
      %v487 = vadd.f32 0.0, %v486
      %v488 = vpop.f32.mrf.mxu0
      %489 = vdwg.mxu0
      %v490 = vadd.f32 %v399, %v484
      %v491 = vadd.f32 %v402, %v487
      %v492 = vadd.f32 %v490, %v491
      %v493 = vrot.slane %v492, 4
      %v494 = vadd.f32 %v492, %v493
      %v495 = vrot.slane %v494, 2
      %v496 = vadd.f32 %v494, %v495
      %v497 = vrot.slane %v496, 1
      %v498 = vadd.f32 %v496, %v497
      %v499 = vadd.f32 %v498, 0.0
      %v500 = vmul.f32 %v490, %v490
      %v501 = vmul.f32 %v491, %v491
      %v502 = vadd.f32 %v500, %v501
      %v503 = vrot.slane %v502, 4
      %v504 = vadd.f32 %v502, %v503
      %v505 = vrot.slane %v504, 2
      %v506 = vadd.f32 %v504, %v505
      %v507 = vrot.slane %v506, 1
      %v508 = vadd.f32 %v506, %v507
      %v509 = vadd.f32 %v508, 0.0
      %v510 = vpack.c.bf16 %v491, %v490
      %v512 = vunpack.c.l.b16 %v510
      %v513 = vunpack.c.h.b16 %v510
      %v514 = vpack.c.b16 %v512, %v512
      %v515 = vpack.c.b16 %v513, %v513
      %518 = vst [vmem:[%s177] sm:$0xf] %v514
      %519 = vst [vmem:[%s177 + $0x4] sm:$0xf] %v515
      %520 = vst [vmem:[%s181] sm:$0x1] %v499
      %521 = vst [vmem:[%s181 + $0x1] sm:$0x1] %v509
      %p522 = scmp.lt.s32.totalorder %s15, 1
      %s523 = scalar_select %p522, %s15, 1
      %s524 = smul.addr %s523, 2
      %s525 = smul.addr %s524, 4
      %s526 = scalar_lea.vmem %s2, %s525
      %p527 = scmp.lt.s32.totalorder %s15, 1
      %s528 = scalar_select %p527, %s15, 1
      %s529 = smul.addr %s528, 2
      %s530 = scalar_lea.vmem %s3, %s529
      // Predicated region
      $region29: #{conv_conv_forward.3} parent=27 // pred_check
        %p531 = pneg %p80
      $region30: #{conv_conv_forward.3} parent=27 // pred_check_branch
        %533 = sbr.rel (%p531) target = $region32
      $region31: #{conv_conv_forward.3} parent=27 // pred_region
        _
      $region32: #{conv_conv_forward.3} parent=27 // pred_fallthru
        _
      // Predicated region
      $region33: #{conv_conv_forward.3} parent=27 // pred_check
        %p534 = pneg %p106
      $region34: #{conv_conv_forward.3} parent=27 // pred_check_branch
        %536 = sbr.rel (%p534) target = $region36
      $region35: #{conv_conv_forward.3} parent=27 // pred_region
        _
      $region36: #{conv_conv_forward.3} parent=27 // pred_fallthru
        _
    $region28: #{conv_conv_forward.3} parent=5 // pred_fallthru
      _
    %p537 = scmp.le.s32.totalorder 2, %s10
    // Predicated region
    $region37: #{conv_conv_forward.3} parent=5 // pred_check
      %p538 = pneg %p537
    $region38: #{conv_conv_forward.3} parent=5 // pred_check_branch
      %540 = sbr.rel (%p538) target = $region40
    $region39: #{conv_conv_forward.3} parent=5 // pred_region
      %s541 = ssub.s32 %s10, 2
      // Predicated region
      $region41: #{conv_conv_forward.3} parent=39 // pred_check
        %p542 = pneg %p86
      $region42: #{conv_conv_forward.3} parent=39 // pred_check_branch
        %544 = sbr.rel (%p542) target = $region44
      $region43: #{conv_conv_forward.3} parent=39 // pred_region
        %p545 = scmp.lt.s32.totalorder %s16, 1
        %s546 = scalar_select %p545, %s16, 1
        %s547 = smul.addr %s546, 2
        %s548 = smul.addr %s547, 4
        %s549 = scalar_lea.vmem %s2, %s548
      $region44: #{conv_conv_forward.3} parent=39 // pred_fallthru
        _
      // Predicated region
      $region45: #{conv_conv_forward.3} parent=39 // pred_check
        %p550 = pneg %p112
      $region46: #{conv_conv_forward.3} parent=39 // pred_check_branch
        %552 = sbr.rel (%p550) target = $region48
      $region47: #{conv_conv_forward.3} parent=39 // pred_region
        %p553 = scmp.lt.s32.totalorder %s16, 1
        %s554 = scalar_select %p553, %s16, 1
        %s555 = smul.addr %s554, 2
        %s556 = scalar_lea.vmem %s3, %s555
      $region48: #{conv_conv_forward.3} parent=39 // pred_fallthru
        _
    $region40: #{conv_conv_forward.3} parent=5 // pred_fallthru
      _
  $region6: #{conv_conv_forward.3} parent=0 // loop_footer
    %s14 = sadd.s32 1, %s10
  $region7: #{conv_conv_forward.3} parent=0 // loop_footer_branch
    %9 = sbr.rel target = $region3
  $region8: #{conv_conv_forward.3} parent=0 // loop_exit
    _

// kernel: conv_conv_forward.4
$region0: #{conv_conv_forward.4}
  #allocation0 [shape = 'u32[]', space=smem, size = 0x4, offset = 0x4, fixed_abs, tag = 'smem constant byte address 0x4 - core index']
  #allocation1 [shape = 'u32[144,128]{1,0:T(1,128)}', space=vmem, size = 0x12000, scoped, tag = 'internal scratch']
  #allocation2 [shape = 'bf16[18,128]{1,0:T(8,128)(2,1)}', space=vmem, size = 0x1800, scoped, tag = 'scratch operand']
  %s0 = inlined_call_operand.vmem [shape: f32[1,128], index: 0, kind: input, shape index: {}]
  %s1 = inlined_call_operand.vmem [shape: f32[1,128], index: 1, kind: input, shape index: {}]
  %s2 = inlined_call_operand.vmem [shape: bf16[2,16,128], index: 2, kind: input, shape index: {}]
  %s3 = inlined_call_operand.vmem [shape: bf16[3,128,128], index: 3, kind: input, shape index: {}]
  %s4 = inlined_call_operand.vmem [shape: bf16[2,16,128], index: 4, kind: output, shape index: {0}]
  %s5 = inlined_call_operand.vmem [shape: f32[2,2,128], index: 5, kind: output, shape index: {1}]
  %6 = xla_tuple %s4, %s5
  %s7 = sld [smem:[#allocation0]]
  $region57: #{conv_conv_forward.4} parent=0
    _
  %s9 = ssub.s32 1, %s7
  %s10 = scalar_select 0, %s9, %s7
  loop: start=0, step=1, limit=4
  $region2: #{conv_conv_forward.4} parent=0 // loop_pre_header
    _
  $region3: #{conv_conv_forward.4} parent=0 // loop_header
    %s12 = sphi 0, %s16
    %p13 = scmp.ge.s32.totalorder %s12, 4
    %s20 = sphi 0, %s20
    %s22 = sphi 0, %s20
    %s23 = sphi 0, %s22
    %s37 = sphi 0, %s23
    %s41 = sphi 0, %s41
    %s43 = sphi 0, %s41
    %s44 = sphi 0, %s43
    %s58 = sphi 0, %s44
    %s64 = sphi 0, %s66
    %s67 = sphi 0, %s64
    %s68 = sphi 0, %s67
    %s84 = sphi 0, %s68
    %s88 = sphi 0, %s88
    %s90 = sphi 0, %s88
    %s91 = sphi 0, %s90
    %s105 = sphi 0, %s91
    %s111 = sphi 0, %s113
    %s114 = sphi 0, %s111
    %s115 = sphi 0, %s114
    %s131 = sphi 0, %s115
    %s137 = sphi 0, %s139
    %s140 = sphi 0, %s137
    %s141 = sphi 0, %s140
    %s157 = sphi 0, %s141
  $region4: #{conv_conv_forward.4} parent=0 // loop_header_branch
    %15 = sbr.rel (%p13) target = $region8
  $region5: #{conv_conv_forward.4} parent=0 // loop_body
    %s17 = ssub.s32 %s12, 1
    %s18 = ssub.s32 %s12, 2
    %s19 = sadd.s32 %s12, 1
    %s21 = sadd.s32 %s20, 1
    %p24 = scmp.eq.s32.totalorder %s12, 1
    %p25 = scmp.ne.s32.totalorder %s20, %s22
    %p26 = scmp.eq.s32.totalorder %s12, 0
    %p27 = por %p25, %p26
    %p28 = scmp.ne.s32.totalorder %s20, %s22
    %p29 = scmp.eq.s32.totalorder %s17, 1
    %p30 = por %p28, %p29
    %p31 = scmp.ne.s32.totalorder %s22, %s23
    %p32 = scmp.eq.s32.totalorder %s17, 0
    %p33 = por %p31, %p32
    %p34 = scmp.ne.s32.totalorder %s22, %s23
    %p35 = scmp.eq.s32.totalorder %s18, 1
    %p36 = por %p34, %p35
    %p38 = scmp.ne.s32.totalorder %s23, %s37
    %p39 = scmp.eq.s32.totalorder %s18, 0
    %p40 = por %p38, %p39
    %s42 = sadd.s32 %s41, 1
    %p45 = scmp.eq.s32.totalorder %s12, 1
    %p46 = scmp.ne.s32.totalorder %s41, %s43
    %p47 = scmp.eq.s32.totalorder %s12, 0
    %p48 = por %p46, %p47
    %p49 = scmp.ne.s32.totalorder %s41, %s43
    %p50 = scmp.eq.s32.totalorder %s17, 1
    %p51 = por %p49, %p50
    %p52 = scmp.ne.s32.totalorder %s43, %s44
    %p53 = scmp.eq.s32.totalorder %s17, 0
    %p54 = por %p52, %p53
    %p55 = scmp.ne.s32.totalorder %s43, %s44
    %p56 = scmp.eq.s32.totalorder %s18, 1
    %p57 = por %p55, %p56
    %p59 = scmp.ne.s32.totalorder %s44, %s58
    %p60 = scmp.eq.s32.totalorder %s18, 0
    %p61 = por %p59, %p60
    %s62 = ssub.s32 %s12, %s19
    %p63 = scmp.eq.s32.totalorder %s62, 0
    %s65 = sadd.s32 %s64, 1
    %s66 = scalar_select %p63, %s64, %s65
    %p69 = pneg %p63
    %p70 = scmp.eq.s32.totalorder %s12, 1
    %p71 = por %p69, %p70
    %p72 = scmp.ne.s32.totalorder %s64, %s67
    %p73 = scmp.eq.s32.totalorder %s12, 0
    %p74 = por %p72, %p73
    %p75 = scmp.ne.s32.totalorder %s64, %s67
    %p76 = scmp.eq.s32.totalorder %s17, 1
    %p77 = por %p75, %p76
    %p78 = scmp.ne.s32.totalorder %s67, %s68
    %p79 = scmp.eq.s32.totalorder %s17, 0
    %p80 = por %p78, %p79
    %p81 = scmp.ne.s32.totalorder %s67, %s68
    %p82 = scmp.eq.s32.totalorder %s18, 1
    %p83 = por %p81, %p82
    %p85 = scmp.ne.s32.totalorder %s68, %s84
    %p86 = scmp.eq.s32.totalorder %s18, 0
    %p87 = por %p85, %p86
    %s89 = sadd.s32 %s88, 1
    %p92 = scmp.eq.s32.totalorder %s12, 1
    %p93 = scmp.ne.s32.totalorder %s88, %s90
    %p94 = scmp.eq.s32.totalorder %s12, 0
    %p95 = por %p93, %p94
    %p96 = scmp.ne.s32.totalorder %s88, %s90
    %p97 = scmp.eq.s32.totalorder %s17, 1
    %p98 = por %p96, %p97
    %p99 = scmp.ne.s32.totalorder %s90, %s91
    %p100 = scmp.eq.s32.totalorder %s17, 0
    %p101 = por %p99, %p100
    %p102 = scmp.ne.s32.totalorder %s90, %s91
    %p103 = scmp.eq.s32.totalorder %s18, 1
    %p104 = por %p102, %p103
    %p106 = scmp.ne.s32.totalorder %s91, %s105
    %p107 = scmp.eq.s32.totalorder %s18, 0
    %p108 = por %p106, %p107
    %s109 = ssub.s32 %s12, %s19
    %p110 = scmp.eq.s32.totalorder %s109, 0
    %s112 = sadd.s32 %s111, 1
    %s113 = scalar_select %p110, %s111, %s112
    %p116 = pneg %p110
    %p117 = scmp.eq.s32.totalorder %s12, 1
    %p118 = por %p116, %p117
    %p119 = scmp.ne.s32.totalorder %s111, %s114
    %p120 = scmp.eq.s32.totalorder %s12, 0
    %p121 = por %p119, %p120
    %p122 = scmp.ne.s32.totalorder %s111, %s114
    %p123 = scmp.eq.s32.totalorder %s17, 1
    %p124 = por %p122, %p123
    %p125 = scmp.ne.s32.totalorder %s114, %s115
    %p126 = scmp.eq.s32.totalorder %s17, 0
    %p127 = por %p125, %p126
    %p128 = scmp.ne.s32.totalorder %s114, %s115
    %p129 = scmp.eq.s32.totalorder %s18, 1
    %p130 = por %p128, %p129
    %p132 = scmp.ne.s32.totalorder %s115, %s131
    %p133 = scmp.eq.s32.totalorder %s18, 0
    %p134 = por %p132, %p133
    %s135 = ssub.s32 %s12, %s19
    %p136 = scmp.eq.s32.totalorder %s135, 0
    %s138 = sadd.s32 %s137, 1
    %s139 = scalar_select %p136, %s137, %s138
    %p142 = pneg %p136
    %p143 = scmp.eq.s32.totalorder %s12, 1
    %p144 = por %p142, %p143
    %p145 = scmp.ne.s32.totalorder %s137, %s140
    %p146 = scmp.eq.s32.totalorder %s12, 0
    %p147 = por %p145, %p146
    %p148 = scmp.ne.s32.totalorder %s137, %s140
    %p149 = scmp.eq.s32.totalorder %s17, 1
    %p150 = por %p148, %p149
    %p151 = scmp.ne.s32.totalorder %s140, %s141
    %p152 = scmp.eq.s32.totalorder %s17, 0
    %p153 = por %p151, %p152
    %p154 = scmp.ne.s32.totalorder %s140, %s141
    %p155 = scmp.eq.s32.totalorder %s18, 1
    %p156 = por %p154, %p155
    %p158 = scmp.ne.s32.totalorder %s141, %s157
    %p159 = scmp.eq.s32.totalorder %s18, 0
    %p160 = por %p158, %p159
    %p161 = scmp.le.s32.totalorder 1, %s12
    %p162 = scmp.lt.s32.totalorder %s12, 3
    %p163 = pnand %p161, %p162
    %p164 = pneg %p163
    // Predicated region
    $region9: #{conv_conv_forward.4} parent=5 // pred_check
      _
    $region10: #{conv_conv_forward.4} parent=5 // pred_check_branch
      %166 = sbr.rel (%p163) target = $region12
    $region11: #{conv_conv_forward.4} parent=5 // pred_region
      %s167 = ssub.s32 %s12, 1
      // Predicated region
      $region13: #{conv_conv_forward.4} parent=11 // pred_check
        %p168 = pneg %p33
      $region14: #{conv_conv_forward.4} parent=11 // pred_check_branch
        %170 = sbr.rel (%p168) target = $region16
      $region15: #{conv_conv_forward.4} parent=11 // pred_region
        _
      $region16: #{conv_conv_forward.4} parent=11 // pred_fallthru
        _
      // Predicated region
      $region17: #{conv_conv_forward.4} parent=11 // pred_check
        %p171 = pneg %p54
      $region18: #{conv_conv_forward.4} parent=11 // pred_check_branch
        %173 = sbr.rel (%p171) target = $region20
      $region19: #{conv_conv_forward.4} parent=11 // pred_region
        _
      $region20: #{conv_conv_forward.4} parent=11 // pred_fallthru
        _
      // Predicated region
      $region21: #{conv_conv_forward.4} parent=11 // pred_check
        %p174 = pneg %p101
      $region22: #{conv_conv_forward.4} parent=11 // pred_check_branch
        %176 = sbr.rel (%p174) target = $region24
      $region23: #{conv_conv_forward.4} parent=11 // pred_region
        _
      $region24: #{conv_conv_forward.4} parent=11 // pred_fallthru
        _
    $region12: #{conv_conv_forward.4} parent=5 // pred_fallthru
      _
    %p177 = scmp.lt.s32.totalorder %s12, 2
    // Predicated region
    $region25: #{conv_conv_forward.4} parent=5 // pred_check
      %p178 = pneg %p177
    $region26: #{conv_conv_forward.4} parent=5 // pred_check_branch
      %180 = sbr.rel (%p178) target = $region28
    $region27: #{conv_conv_forward.4} parent=5 // pred_region
      // Predicated region
      $region29: #{conv_conv_forward.4} parent=27 // pred_check
        %p181 = pneg %p74
      $region30: #{conv_conv_forward.4} parent=27 // pred_check_branch
        %183 = sbr.rel (%p181) target = $region32
      $region31: #{conv_conv_forward.4} parent=27 // pred_region
        %p184 = scmp.lt.s32.totalorder %s12, 1
        %s185 = scalar_select %p184, %s12, 1
        %s186 = smul.addr %s185, 2
        %s187 = smul.addr %s186, 4
        %s188 = scalar_lea.vmem %s2, %s187
      $region32: #{conv_conv_forward.4} parent=27 // pred_fallthru
        _
    $region28: #{conv_conv_forward.4} parent=5 // pred_fallthru
      _
    %p189 = scmp.le.s32.totalorder 1, %s12
    %p190 = scmp.lt.s32.totalorder %s12, 3
    %p191 = pnand %p189, %p190
    %p192 = pneg %p191
    // Predicated region
    $region33: #{conv_conv_forward.4} parent=5 // pred_check
      _
    $region34: #{conv_conv_forward.4} parent=5 // pred_check_branch
      %194 = sbr.rel (%p191) target = $region36
    $region35: #{conv_conv_forward.4} parent=5 // pred_region
      %s195 = ssub.s32 %s12, 1
      %p196 = pneg %p33
      %p197 = pneg %p30
      %p198 = pneg %p54
      %p199 = pneg %p51
      %p200 = scmp.lt.s32.totalorder %s17, 1
      %s201 = scalar_select %p200, %s17, 1
      %s202 = smul.addr %s201, 2
      %s203 = smul.addr %s202, 4
      %s204 = scalar_lea.vmem %s2, %s203
      %p205 = pneg %p80
      %p206 = pneg %p77
      %p207 = pneg %p101
      %p208 = pneg %p98
      %p209 = pneg %p127
      %p210 = pneg %p124
      %p211 = scmp.lt.s32.totalorder %s17, 1
      %s212 = scalar_select %p211, %s17, 1
      %s213 = smul.addr %s212, 2
      %s214 = smul.addr %s213, 4
      %s215 = scalar_lea.vmem %s4, %s214
      %p216 = pneg %p153
      %p217 = pneg %p150
      %p218 = scmp.lt.s32.totalorder %s17, 1
      %s219 = scalar_select %p218, %s17, 1
      %s220 = smul.addr %s219, 2
      %s221 = scalar_lea.vmem %s5, %s220
      %p222 = scmp.lt.s32.totalorder %s17, 1
      %s223 = scalar_select %p222, %s17, 1
      %s224 = smul.addr %s223, 2
      %s225 = smul.addr %s224, 4
      %s226 = scalar_lea.vmem %s2, %s225
      %p227 = scmp.lt.s32.totalorder %s17, 1
      %s228 = scalar_select %p227, %s17, 1
      %s229 = smul.addr %s228, 2
      %s230 = smul.addr %s229, 4
      %s231 = scalar_lea.vmem %s4, %s230
      %p232 = scmp.lt.s32.totalorder %s17, 1
      %s233 = scalar_select %p232, %s17, 1
      %s234 = smul.addr %s233, 2
      %s235 = scalar_lea.vmem %s5, %s234
      %vm237 = vcmask 1040384
      %vm238 = vsmask.f32 256
      %vm239 = vmand %vm237, %vm238
      %v240 = vld [vmem:[#allocation2] sm:$0x1]
      %v241 = vsel %vm239, 0, %v240
      %242 = vst [vmem:[#allocation2] sm:$0x1] %v241
      %vm243 = vsmask.f32 7938
      %vm244 = vmand %vm237, %vm243
      %v245 = vld [vmem:[#allocation2 + $0x8] sm:$0x1]
      %v246 = vsel %vm244, 0, %v245
      %247 = vst [vmem:[#allocation2 + $0x8] sm:$0x1] %v246
      %v248 = vld [vmem:[%s226] sm:$0xf]
      %v249 = vld [vmem:[%s226 + $0x4] sm:$0xf]
      %v250 = vunpack.c.l.bf16 %v248
      %v251 = vunpack.c.l.bf16 %v249
      %v252 = vld [vmem:[%s0] sm:$0x1]
      %v254 = vlaneseq
      %v255 = vshrl.u32 %v254, 7
      %v256 = vsub.s32 0, %v255
      %v257 = vrot.slane %v252, %v256
      %v259 = vmul.f32 %v250, %v257
      %v260 = vmul.f32 %v251, %v257
      %v261 = vld [vmem:[%s1] sm:$0x1]
      %v263 = vlaneseq
      %v264 = vshrl.u32 %v263, 7
      %v265 = vsub.s32 0, %v264
      %v266 = vrot.slane %v261, %v265
      %v268 = vadd.f32 %v259, %v266
      %v269 = vadd.f32 %v260, %v266
      %v270 = vmax.f32 %v268, 0.0
      %v271 = vmax.f32 %v269, 0.0
      %v272 = vpack.c.bf16 %v271, %v270
      %v274 = vunpack.c.l.b16 %v272
      %v275 = vunpack.c.h.b16 %v272
      %v276 = vpack.c.b16 %v274, %v274
      %v277 = vpack.c.b16 %v275, %v275
      %vm278 = vsmask.f32 4368
      %vm279 = vmor %vm238, %vm278
      %v281 = vshrl.u32 %v276, 16
      %v283 = vrot.slane %v281, 7
      %v284 = vshll.u32 %v276, 16
      %v286 = vor.u32 %v283, %v284
      %v287 = vrot.slane %v283, 4
      %v289 = vshrl.u32 %v277, 16
      %v291 = vrot.slane %v289, 7
      %v292 = vshll.u32 %v277, 16
      %v294 = vor.u32 %v291, %v292
      %v295 = vsel %vm279, %v287, %v294
      %v296 = vrot.slane %v291, 4
      %vm300 = vcmask 1043456
      %vm301 = vmand %vm300, %vm243
      %v302 = vld [vmem:[#allocation2] sm:$0xf]
      %v303 = vsel %vm301, %v286, %v302
      %304 = vst [vmem:[#allocation2] sm:$0xf] %v303
      %305 = vst [vmem:[#allocation2 + $0x4] sm:$0xf] %v295
      %v306 = vld [vmem:[#allocation2 + $0x8] sm:$0x1]
      %v307 = vsel %vm239, %v296, %v306
      %308 = vst [vmem:[#allocation2 + $0x8] sm:$0x1] %v307
      %v309 = vld [vmem:[#allocation2] sm:$0xf]
      %v310 = vld [vmem:[#allocation2 + $0x4] sm:$0xf]
      %v311 = vld [vmem:[%s3] sm:$0xf]
      %v312 = vld [vmem:[%s3 + $0x4] sm:$0xf]
      %v313 = vld [vmem:[%s3 + $0x8] sm:$0xf]
      %v314 = vld [vmem:[%s3 + $0xc] sm:$0xf]
      %v315 = vld [vmem:[%s3 + $0x10] sm:$0xf]
      %v316 = vld [vmem:[%s3 + $0x14] sm:$0xf]
      %v317 = vld [vmem:[%s3 + $0x18] sm:$0xf]
      %v318 = vld [vmem:[%s3 + $0x1c] sm:$0xf]
      %v319 = vld [vmem:[%s3 + $0x20] sm:$0xf]
      %v320 = vld [vmem:[%s3 + $0x24] sm:$0xf]
      %v321 = vld [vmem:[%s3 + $0x28] sm:$0xf]
      %v322 = vld [vmem:[%s3 + $0x2c] sm:$0xf]
      %v323 = vld [vmem:[%s3 + $0x30] sm:$0xf]
      %v324 = vld [vmem:[%s3 + $0x34] sm:$0xf]
      %v325 = vld [vmem:[%s3 + $0x38] sm:$0xf]
      %v326 = vld [vmem:[%s3 + $0x3c] sm:$0xf]
      %v327 = vld [vmem:[#allocation2 + $0x8] sm:$0x1]
      %s328 = scalar_lea.vmem %s3, 64
      %v329 = vld [vmem:[%s328] sm:$0xf]
      %v330 = vld [vmem:[%s328 + $0x4] sm:$0xf]
      %v331 = vld [vmem:[%s328 + $0x8] sm:$0xf]
      %v332 = vld [vmem:[%s328 + $0xc] sm:$0xf]
      %v333 = vld [vmem:[%s328 + $0x10] sm:$0xf]
      %v334 = vld [vmem:[%s328 + $0x14] sm:$0xf]
      %v335 = vld [vmem:[%s328 + $0x18] sm:$0xf]
      %v336 = vld [vmem:[%s328 + $0x1c] sm:$0xf]
      %v337 = vld [vmem:[%s328 + $0x20] sm:$0xf]
      %v338 = vld [vmem:[%s328 + $0x24] sm:$0xf]
      %v339 = vld [vmem:[%s328 + $0x28] sm:$0xf]
      %v340 = vld [vmem:[%s328 + $0x2c] sm:$0xf]
      %v341 = vld [vmem:[%s328 + $0x30] sm:$0xf]
      %v342 = vld [vmem:[%s328 + $0x34] sm:$0xf]
      %v343 = vld [vmem:[%s328 + $0x38] sm:$0xf]
      %v344 = vld [vmem:[%s328 + $0x3c] sm:$0xf]
      %v348 = vunpack.c.l.b16 %v309
      %v349 = vunpack.c.l.b16 %v310
      %v350 = vunpack.c.l.b16 %v327
      %v351 = vpack.c.b16 %v349, %v348
      %v352 = vpack.c.b16 %v350, %v350
      %vm353 = vsmask.f32 7424
      %v355 = vshrl.u32 %v351, 16
      %v357 = vshll.u32 %v351, 16
      %v359 = vrot.slane %v357, 1
      %v360 = vor.u32 %v355, %v359
      %v362 = vshll.u32 %v352, 16
      %v364 = vrot.slane %v362, 1
      %v365 = vsel %vm353, %v360, %v364
      %v383 = vunpack.c.l.b16 %v329
      %v384 = vunpack.c.l.b16 %v330
      %v385 = vunpack.c.l.b16 %v331
      %v386 = vunpack.c.l.b16 %v332
      %v387 = vunpack.c.l.b16 %v333
      %v388 = vunpack.c.l.b16 %v334
      %v389 = vunpack.c.l.b16 %v335
      %v390 = vunpack.c.l.b16 %v336
      %v391 = vunpack.c.l.b16 %v337
      %v392 = vunpack.c.l.b16 %v338
      %v393 = vunpack.c.l.b16 %v339
      %v394 = vunpack.c.l.b16 %v340
      %v395 = vunpack.c.l.b16 %v341
      %v396 = vunpack.c.l.b16 %v342
      %v397 = vunpack.c.l.b16 %v343
      %v398 = vunpack.c.l.b16 %v344
      %v399 = vpack.c.b16 %v384, %v383
      %v400 = vpack.c.b16 %v386, %v385
      %v401 = vpack.c.b16 %v388, %v387
      %v402 = vpack.c.b16 %v390, %v389
      %v403 = vpack.c.b16 %v392, %v391
      %v404 = vpack.c.b16 %v394, %v393
      %v405 = vpack.c.b16 %v396, %v395
      %v406 = vpack.c.b16 %v398, %v397
      %415 = vmatprep.subr.bf16.mxu0 0
      %416 = vmatpush1.bf16.msra.mxu0 %v406
      %417 = vmatprep.subr.bf16.mxu0 0
      %418 = vmatpush1.bf16.msra.mxu0 %v405
      %419 = vmatprep.subr.bf16.mxu0 0
      %420 = vmatpush1.bf16.msra.mxu0 %v404
      %421 = vmatprep.subr.bf16.mxu0 0
      %422 = vmatpush1.bf16.msra.mxu0 %v403
      %423 = vmatprep.subr.bf16.mxu0 0
      %424 = vmatpush1.bf16.msra.mxu0 %v402
      %425 = vmatprep.subr.bf16.mxu0 0
      %426 = vmatpush1.bf16.msra.mxu0 %v401
      %427 = vmatprep.subr.bf16.mxu0 0
      %428 = vmatpush1.bf16.msra.mxu0 %v400
      %429 = vmatprep.subr.bf16.mxu0 0
      %430 = vmatpush1.bf16.msra.mxu0 %v399
      %431 = vmatprep.subr.bf16.mxu0 0
      %432 = vmatpush2.bf16.msra.mxu0 0
      %433 = vmatprep.subr.bf16.mxu0 0
      %434 = vmatpush2.bf16.msra.mxu0 0
      %435 = vmatprep.subr.bf16.mxu0 0
      %436 = vmatpush2.bf16.msra.mxu0 0
      %437 = vmatprep.subr.bf16.mxu0 0
      %438 = vmatpush2.bf16.msra.mxu0 0
      %439 = vmatprep.subr.bf16.mxu0 0
      %440 = vmatpush2.bf16.msra.mxu0 0
      %441 = vmatprep.subr.bf16.mxu0 0
      %442 = vmatpush2.bf16.msra.mxu0 0
      %443 = vmatprep.subr.bf16.mxu0 0
      %444 = vmatpush2.bf16.msra.mxu0 0
      %445 = vmatprep.subr.bf16.mxu0 0
      %446 = vmatpush2.bf16.msra.mxu0 0
      %447 = vmatprep.mubr.bf16.mxu0 0
      %448 = vmatmul.mubr.bf16.gmra.mxu0 %v365
      %v449 = vpop.f32.mrf.mxu0
      %v450 = vadd.f32 0.0, %v449
      %v451 = vpop.f32.mrf.mxu0
      %v452 = vpop.f32.mrf.mxu0
      %v453 = vadd.f32 0.0, %v452
      %v454 = vpop.f32.mrf.mxu0
      %455 = vdwg.mxu0
      %v473 = vunpack.c.l.b16 %v311
      %v474 = vunpack.c.l.b16 %v312
      %v475 = vunpack.c.l.b16 %v313
      %v476 = vunpack.c.l.b16 %v314
      %v477 = vunpack.c.l.b16 %v315
      %v478 = vunpack.c.l.b16 %v316
      %v479 = vunpack.c.l.b16 %v317
      %v480 = vunpack.c.l.b16 %v318
      %v481 = vunpack.c.l.b16 %v319
      %v482 = vunpack.c.l.b16 %v320
      %v483 = vunpack.c.l.b16 %v321
      %v484 = vunpack.c.l.b16 %v322
      %v485 = vunpack.c.l.b16 %v323
      %v486 = vunpack.c.l.b16 %v324
      %v487 = vunpack.c.l.b16 %v325
      %v488 = vunpack.c.l.b16 %v326
      %v489 = vpack.c.b16 %v474, %v473
      %v490 = vpack.c.b16 %v476, %v475
      %v491 = vpack.c.b16 %v478, %v477
      %v492 = vpack.c.b16 %v480, %v479
      %v493 = vpack.c.b16 %v482, %v481
      %v494 = vpack.c.b16 %v484, %v483
      %v495 = vpack.c.b16 %v486, %v485
      %v496 = vpack.c.b16 %v488, %v487
      %505 = vmatprep.subr.bf16.mxu0 0
      %506 = vmatpush1.bf16.msra.mxu0 %v496
      %507 = vmatprep.subr.bf16.mxu0 0
      %508 = vmatpush1.bf16.msra.mxu0 %v495
      %509 = vmatprep.subr.bf16.mxu0 0
      %510 = vmatpush1.bf16.msra.mxu0 %v494
      %511 = vmatprep.subr.bf16.mxu0 0
      %512 = vmatpush1.bf16.msra.mxu0 %v493
      %513 = vmatprep.subr.bf16.mxu0 0
      %514 = vmatpush1.bf16.msra.mxu0 %v492
      %515 = vmatprep.subr.bf16.mxu0 0
      %516 = vmatpush1.bf16.msra.mxu0 %v491
      %517 = vmatprep.subr.bf16.mxu0 0
      %518 = vmatpush1.bf16.msra.mxu0 %v490
      %519 = vmatprep.subr.bf16.mxu0 0
      %520 = vmatpush1.bf16.msra.mxu0 %v489
      %521 = vmatprep.subr.bf16.mxu0 0
      %522 = vmatpush2.bf16.msra.mxu0 0
      %523 = vmatprep.subr.bf16.mxu0 0
      %524 = vmatpush2.bf16.msra.mxu0 0
      %525 = vmatprep.subr.bf16.mxu0 0
      %526 = vmatpush2.bf16.msra.mxu0 0
      %527 = vmatprep.subr.bf16.mxu0 0
      %528 = vmatpush2.bf16.msra.mxu0 0
      %529 = vmatprep.subr.bf16.mxu0 0
      %530 = vmatpush2.bf16.msra.mxu0 0
      %531 = vmatprep.subr.bf16.mxu0 0
      %532 = vmatpush2.bf16.msra.mxu0 0
      %533 = vmatprep.subr.bf16.mxu0 0
      %534 = vmatpush2.bf16.msra.mxu0 0
      %535 = vmatprep.subr.bf16.mxu0 0
      %536 = vmatpush2.bf16.msra.mxu0 0
      %537 = vmatprep.mubr.bf16.mxu0 0
      %538 = vmatmul.mubr.bf16.gmra.mxu0 %v351
      %v539 = vpop.f32.mrf.mxu0
      %v540 = vadd.f32 %v450, %v539
      %v541 = vpop.f32.mrf.mxu0
      %v542 = vpop.f32.mrf.mxu0
      %v543 = vadd.f32 %v453, %v542
      %v544 = vpop.f32.mrf.mxu0
      %545 = vdwg.mxu0
      %v546 = vld [vmem:[#allocation2] sm:$0xe]
      %s547 = scalar_lea.vmem %s3, 128
      %v548 = vld [vmem:[%s547] sm:$0xf]
      %v549 = vld [vmem:[%s547 + $0x4] sm:$0xf]
      %v550 = vld [vmem:[%s547 + $0x8] sm:$0xf]
      %v551 = vld [vmem:[%s547 + $0xc] sm:$0xf]
      %v552 = vld [vmem:[%s547 + $0x10] sm:$0xf]
      %v553 = vld [vmem:[%s547 + $0x14] sm:$0xf]
      %v554 = vld [vmem:[%s547 + $0x18] sm:$0xf]
      %v555 = vld [vmem:[%s547 + $0x1c] sm:$0xf]
      %v556 = vld [vmem:[%s547 + $0x20] sm:$0xf]
      %v557 = vld [vmem:[%s547 + $0x24] sm:$0xf]
      %v558 = vld [vmem:[%s547 + $0x28] sm:$0xf]
      %v559 = vld [vmem:[%s547 + $0x2c] sm:$0xf]
      %v560 = vld [vmem:[%s547 + $0x30] sm:$0xf]
      %v561 = vld [vmem:[%s547 + $0x34] sm:$0xf]
      %v562 = vld [vmem:[%s547 + $0x38] sm:$0xf]
      %v563 = vld [vmem:[%s547 + $0x3c] sm:$0xf]
      %v565 = vunpack.c.l.b16 %v546
      %v566 = vpack.c.b16 %v349, %v565
      %vm567 = vcmask 1046528
      %v568 = vrot.slane %v566, 1
      %v569 = vrot.slane %v352, 1
      %v570 = vsel %vm567, %v568, %v569
      %v588 = vunpack.c.l.b16 %v548
      %v589 = vunpack.c.l.b16 %v549
      %v590 = vunpack.c.l.b16 %v550
      %v591 = vunpack.c.l.b16 %v551
      %v592 = vunpack.c.l.b16 %v552
      %v593 = vunpack.c.l.b16 %v553
      %v594 = vunpack.c.l.b16 %v554
      %v595 = vunpack.c.l.b16 %v555
      %v596 = vunpack.c.l.b16 %v556
      %v597 = vunpack.c.l.b16 %v557
      %v598 = vunpack.c.l.b16 %v558
      %v599 = vunpack.c.l.b16 %v559
      %v600 = vunpack.c.l.b16 %v560
      %v601 = vunpack.c.l.b16 %v561
      %v602 = vunpack.c.l.b16 %v562
      %v603 = vunpack.c.l.b16 %v563
      %v604 = vpack.c.b16 %v589, %v588
      %v605 = vpack.c.b16 %v591, %v590
      %v606 = vpack.c.b16 %v593, %v592
      %v607 = vpack.c.b16 %v595, %v594
      %v608 = vpack.c.b16 %v597, %v596
      %v609 = vpack.c.b16 %v599, %v598
      %v610 = vpack.c.b16 %v601, %v600
      %v611 = vpack.c.b16 %v603, %v602
      %620 = vmatprep.subr.bf16.mxu0 0
      %621 = vmatpush1.bf16.msra.mxu0 %v611
      %622 = vmatprep.subr.bf16.mxu0 0
      %623 = vmatpush1.bf16.msra.mxu0 %v610
      %624 = vmatprep.subr.bf16.mxu0 0
      %625 = vmatpush1.bf16.msra.mxu0 %v609
      %626 = vmatprep.subr.bf16.mxu0 0
      %627 = vmatpush1.bf16.msra.mxu0 %v608
      %628 = vmatprep.subr.bf16.mxu0 0
      %629 = vmatpush1.bf16.msra.mxu0 %v607
      %630 = vmatprep.subr.bf16.mxu0 0
      %631 = vmatpush1.bf16.msra.mxu0 %v606
      %632 = vmatprep.subr.bf16.mxu0 0
      %633 = vmatpush1.bf16.msra.mxu0 %v605
      %634 = vmatprep.subr.bf16.mxu0 0
      %635 = vmatpush1.bf16.msra.mxu0 %v604
      %636 = vmatprep.subr.bf16.mxu0 0
      %637 = vmatpush2.bf16.msra.mxu0 0
      %638 = vmatprep.subr.bf16.mxu0 0
      %639 = vmatpush2.bf16.msra.mxu0 0
      %640 = vmatprep.subr.bf16.mxu0 0
      %641 = vmatpush2.bf16.msra.mxu0 0
      %642 = vmatprep.subr.bf16.mxu0 0
      %643 = vmatpush2.bf16.msra.mxu0 0
      %644 = vmatprep.subr.bf16.mxu0 0
      %645 = vmatpush2.bf16.msra.mxu0 0
      %646 = vmatprep.subr.bf16.mxu0 0
      %647 = vmatpush2.bf16.msra.mxu0 0
      %648 = vmatprep.subr.bf16.mxu0 0
      %649 = vmatpush2.bf16.msra.mxu0 0
      %650 = vmatprep.subr.bf16.mxu0 0
      %651 = vmatpush2.bf16.msra.mxu0 0
      %652 = vmatprep.mubr.bf16.mxu0 0
      %653 = vmatmul.mubr.bf16.gmra.mxu0 %v570
      %v654 = vpop.f32.mrf.mxu0
      %v655 = vadd.f32 0.0, %v654
      %v656 = vpop.f32.mrf.mxu0
      %v657 = vpop.f32.mrf.mxu0
      %v658 = vadd.f32 0.0, %v657
      %v659 = vpop.f32.mrf.mxu0
      %660 = vdwg.mxu0
      %v661 = vadd.f32 %v540, %v655
      %v662 = vadd.f32 %v543, %v658
      %v663 = vadd.f32 %v661, %v662
      %v664 = vrot.slane %v663, 4
      %v665 = vadd.f32 %v663, %v664
      %v666 = vrot.slane %v665, 2
      %v667 = vadd.f32 %v665, %v666
      %v668 = vrot.slane %v667, 1
      %v669 = vadd.f32 %v667, %v668
      %v670 = vadd.f32 %v669, 0.0
      %v671 = vmul.f32 %v661, %v661
      %v672 = vmul.f32 %v662, %v662
      %v673 = vadd.f32 %v671, %v672
      %v674 = vrot.slane %v673, 4
      %v675 = vadd.f32 %v673, %v674
      %v676 = vrot.slane %v675, 2
      %v677 = vadd.f32 %v675, %v676
      %v678 = vrot.slane %v677, 1
      %v679 = vadd.f32 %v677, %v678
      %v680 = vadd.f32 %v679, 0.0
      %v681 = vpack.c.bf16 %v662, %v661
      %v683 = vunpack.c.l.b16 %v681
      %v684 = vunpack.c.h.b16 %v681
      %v685 = vpack.c.b16 %v683, %v683
      %v686 = vpack.c.b16 %v684, %v684
      %689 = vst [vmem:[%s231] sm:$0xf] %v685
      %690 = vst [vmem:[%s231 + $0x4] sm:$0xf] %v686
      %691 = vst [vmem:[%s235] sm:$0x1] %v670
      %692 = vst [vmem:[%s235 + $0x1] sm:$0x1] %v680
      %p693 = scmp.lt.s32.totalorder %s17, 1
      %s694 = scalar_select %p693, %s17, 1
      %s695 = smul.addr %s694, 2
      %s696 = smul.addr %s695, 4
      %s697 = scalar_lea.vmem %s4, %s696
      %p698 = scmp.lt.s32.totalorder %s17, 1
      %s699 = scalar_select %p698, %s17, 1
      %s700 = smul.addr %s699, 2
      %s701 = scalar_lea.vmem %s5, %s700
      // Predicated region
      $region37: #{conv_conv_forward.4} parent=35 // pred_check
        %p702 = pneg %p124
      $region38: #{conv_conv_forward.4} parent=35 // pred_check_branch
        %704 = sbr.rel (%p702) target = $region40
      $region39: #{conv_conv_forward.4} parent=35 // pred_region
        _
      $region40: #{conv_conv_forward.4} parent=35 // pred_fallthru
        _
      // Predicated region
      $region41: #{conv_conv_forward.4} parent=35 // pred_check
        %p705 = pneg %p150
      $region42: #{conv_conv_forward.4} parent=35 // pred_check_branch
        %707 = sbr.rel (%p705) target = $region44
      $region43: #{conv_conv_forward.4} parent=35 // pred_region
        _
      $region44: #{conv_conv_forward.4} parent=35 // pred_fallthru
        _
    $region36: #{conv_conv_forward.4} parent=5 // pred_fallthru
      _
    %p708 = scmp.le.s32.totalorder 2, %s12
    // Predicated region
    $region45: #{conv_conv_forward.4} parent=5 // pred_check
      %p709 = pneg %p708
    $region46: #{conv_conv_forward.4} parent=5 // pred_check_branch
      %711 = sbr.rel (%p709) target = $region48
    $region47: #{conv_conv_forward.4} parent=5 // pred_region
      %s712 = ssub.s32 %s12, 2
      // Predicated region
      $region49: #{conv_conv_forward.4} parent=47 // pred_check
        %p713 = pneg %p130
      $region50: #{conv_conv_forward.4} parent=47 // pred_check_branch
        %715 = sbr.rel (%p713) target = $region52
      $region51: #{conv_conv_forward.4} parent=47 // pred_region
        %p716 = scmp.lt.s32.totalorder %s18, 1
        %s717 = scalar_select %p716, %s18, 1
        %s718 = smul.addr %s717, 2
        %s719 = smul.addr %s718, 4
        %s720 = scalar_lea.vmem %s4, %s719
      $region52: #{conv_conv_forward.4} parent=47 // pred_fallthru
        _
      // Predicated region
      $region53: #{conv_conv_forward.4} parent=47 // pred_check
        %p721 = pneg %p156
      $region54: #{conv_conv_forward.4} parent=47 // pred_check_branch
        %723 = sbr.rel (%p721) target = $region56
      $region55: #{conv_conv_forward.4} parent=47 // pred_region
        %p724 = scmp.lt.s32.totalorder %s18, 1
        %s725 = scalar_select %p724, %s18, 1
        %s726 = smul.addr %s725, 2
        %s727 = scalar_lea.vmem %s5, %s726
      $region56: #{conv_conv_forward.4} parent=47 // pred_fallthru
        _
    $region48: #{conv_conv_forward.4} parent=5 // pred_fallthru
      _
  $region6: #{conv_conv_forward.4} parent=0 // loop_footer
    %s16 = sadd.s32 1, %s12
  $region7: #{conv_conv_forward.4} parent=0 // loop_footer_branch
    %11 = sbr.rel target = $region3
  $region8: #{conv_conv_forward.4} parent=0 // loop_exit
    _

// kernel: conv_conv_forward.5
$region0: #{conv_conv_forward.5}
  #allocation0 [shape = 'u32[]', space=smem, size = 0x4, offset = 0x4, fixed_abs, tag = 'smem constant byte address 0x4 - core index']
  #allocation1 [shape = 'u32[144,128]{1,0:T(1,128)}', space=vmem, size = 0x12000, scoped, tag = 'internal scratch']
  %s0 = inlined_call_operand.vmem [shape: f32[1,128], index: 0, kind: input, shape index: {}]
  %s1 = inlined_call_operand.vmem [shape: f32[1,128], index: 1, kind: input, shape index: {}]
  %s2 = inlined_call_operand.vmem [shape: bf16[2,16,128], index: 2, kind: input, shape index: {}]
  %s3 = inlined_call_operand.vmem [shape: f32[2,16,128], index: 3, kind: output, shape index: {}]
  %s4 = sld [smem:[#allocation0]]
  $region45: #{conv_conv_forward.5} parent=0
    _
  %s6 = ssub.s32 1, %s4
  %s7 = scalar_select 0, %s6, %s4
  loop: start=0, step=1, limit=4
  $region2: #{conv_conv_forward.5} parent=0 // loop_pre_header
    _
  $region3: #{conv_conv_forward.5} parent=0 // loop_header
    %s9 = sphi 0, %s13
    %p10 = scmp.ge.s32.totalorder %s9, 4
    %s17 = sphi 0, %s17
    %s19 = sphi 0, %s17
    %s20 = sphi 0, %s19
    %s34 = sphi 0, %s20
    %s38 = sphi 0, %s38
    %s40 = sphi 0, %s38
    %s41 = sphi 0, %s40
    %s55 = sphi 0, %s41
    %s61 = sphi 0, %s63
    %s64 = sphi 0, %s61
    %s65 = sphi 0, %s64
    %s81 = sphi 0, %s65
    %s87 = sphi 0, %s89
    %s90 = sphi 0, %s87
    %s91 = sphi 0, %s90
    %s107 = sphi 0, %s91
  $region4: #{conv_conv_forward.5} parent=0 // loop_header_branch
    %12 = sbr.rel (%p10) target = $region8
  $region5: #{conv_conv_forward.5} parent=0 // loop_body
    %s14 = ssub.s32 %s9, 1
    %s15 = ssub.s32 %s9, 2
    %s16 = sadd.s32 %s9, 1
    %s18 = sadd.s32 %s17, 1
    %p21 = scmp.eq.s32.totalorder %s9, 1
    %p22 = scmp.ne.s32.totalorder %s17, %s19
    %p23 = scmp.eq.s32.totalorder %s9, 0
    %p24 = por %p22, %p23
    %p25 = scmp.ne.s32.totalorder %s17, %s19
    %p26 = scmp.eq.s32.totalorder %s14, 1
    %p27 = por %p25, %p26
    %p28 = scmp.ne.s32.totalorder %s19, %s20
    %p29 = scmp.eq.s32.totalorder %s14, 0
    %p30 = por %p28, %p29
    %p31 = scmp.ne.s32.totalorder %s19, %s20
    %p32 = scmp.eq.s32.totalorder %s15, 1
    %p33 = por %p31, %p32
    %p35 = scmp.ne.s32.totalorder %s20, %s34
    %p36 = scmp.eq.s32.totalorder %s15, 0
    %p37 = por %p35, %p36
    %s39 = sadd.s32 %s38, 1
    %p42 = scmp.eq.s32.totalorder %s9, 1
    %p43 = scmp.ne.s32.totalorder %s38, %s40
    %p44 = scmp.eq.s32.totalorder %s9, 0
    %p45 = por %p43, %p44
    %p46 = scmp.ne.s32.totalorder %s38, %s40
    %p47 = scmp.eq.s32.totalorder %s14, 1
    %p48 = por %p46, %p47
    %p49 = scmp.ne.s32.totalorder %s40, %s41
    %p50 = scmp.eq.s32.totalorder %s14, 0
    %p51 = por %p49, %p50
    %p52 = scmp.ne.s32.totalorder %s40, %s41
    %p53 = scmp.eq.s32.totalorder %s15, 1
    %p54 = por %p52, %p53
    %p56 = scmp.ne.s32.totalorder %s41, %s55
    %p57 = scmp.eq.s32.totalorder %s15, 0
    %p58 = por %p56, %p57
    %s59 = ssub.s32 %s9, %s16
    %p60 = scmp.eq.s32.totalorder %s59, 0
    %s62 = sadd.s32 %s61, 1
    %s63 = scalar_select %p60, %s61, %s62
    %p66 = pneg %p60
    %p67 = scmp.eq.s32.totalorder %s9, 1
    %p68 = por %p66, %p67
    %p69 = scmp.ne.s32.totalorder %s61, %s64
    %p70 = scmp.eq.s32.totalorder %s9, 0
    %p71 = por %p69, %p70
    %p72 = scmp.ne.s32.totalorder %s61, %s64
    %p73 = scmp.eq.s32.totalorder %s14, 1
    %p74 = por %p72, %p73
    %p75 = scmp.ne.s32.totalorder %s64, %s65
    %p76 = scmp.eq.s32.totalorder %s14, 0
    %p77 = por %p75, %p76
    %p78 = scmp.ne.s32.totalorder %s64, %s65
    %p79 = scmp.eq.s32.totalorder %s15, 1
    %p80 = por %p78, %p79
    %p82 = scmp.ne.s32.totalorder %s65, %s81
    %p83 = scmp.eq.s32.totalorder %s15, 0
    %p84 = por %p82, %p83
    %s85 = ssub.s32 %s9, %s16
    %p86 = scmp.eq.s32.totalorder %s85, 0
    %s88 = sadd.s32 %s87, 1
    %s89 = scalar_select %p86, %s87, %s88
    %p92 = pneg %p86
    %p93 = scmp.eq.s32.totalorder %s9, 1
    %p94 = por %p92, %p93
    %p95 = scmp.ne.s32.totalorder %s87, %s90
    %p96 = scmp.eq.s32.totalorder %s9, 0
    %p97 = por %p95, %p96
    %p98 = scmp.ne.s32.totalorder %s87, %s90
    %p99 = scmp.eq.s32.totalorder %s14, 1
    %p100 = por %p98, %p99
    %p101 = scmp.ne.s32.totalorder %s90, %s91
    %p102 = scmp.eq.s32.totalorder %s14, 0
    %p103 = por %p101, %p102
    %p104 = scmp.ne.s32.totalorder %s90, %s91
    %p105 = scmp.eq.s32.totalorder %s15, 1
    %p106 = por %p104, %p105
    %p108 = scmp.ne.s32.totalorder %s91, %s107
    %p109 = scmp.eq.s32.totalorder %s15, 0
    %p110 = por %p108, %p109
    %p111 = scmp.le.s32.totalorder 1, %s9
    %p112 = scmp.lt.s32.totalorder %s9, 3
    %p113 = pnand %p111, %p112
    %p114 = pneg %p113
    // Predicated region
    $region9: #{conv_conv_forward.5} parent=5 // pred_check
      _
    $region10: #{conv_conv_forward.5} parent=5 // pred_check_branch
      %116 = sbr.rel (%p113) target = $region12
    $region11: #{conv_conv_forward.5} parent=5 // pred_region
      %s117 = ssub.s32 %s9, 1
      // Predicated region
      $region13: #{conv_conv_forward.5} parent=11 // pred_check
        %p118 = pneg %p30
      $region14: #{conv_conv_forward.5} parent=11 // pred_check_branch
        %120 = sbr.rel (%p118) target = $region16
      $region15: #{conv_conv_forward.5} parent=11 // pred_region
        _
      $region16: #{conv_conv_forward.5} parent=11 // pred_fallthru
        _
      // Predicated region
      $region17: #{conv_conv_forward.5} parent=11 // pred_check
        %p121 = pneg %p51
      $region18: #{conv_conv_forward.5} parent=11 // pred_check_branch
        %123 = sbr.rel (%p121) target = $region20
      $region19: #{conv_conv_forward.5} parent=11 // pred_region
        _
      $region20: #{conv_conv_forward.5} parent=11 // pred_fallthru
        _
    $region12: #{conv_conv_forward.5} parent=5 // pred_fallthru
      _
    %p124 = scmp.lt.s32.totalorder %s9, 2
    // Predicated region
    $region21: #{conv_conv_forward.5} parent=5 // pred_check
      %p125 = pneg %p124
    $region22: #{conv_conv_forward.5} parent=5 // pred_check_branch
      %127 = sbr.rel (%p125) target = $region24
    $region23: #{conv_conv_forward.5} parent=5 // pred_region
      // Predicated region
      $region25: #{conv_conv_forward.5} parent=23 // pred_check
        %p128 = pneg %p71
      $region26: #{conv_conv_forward.5} parent=23 // pred_check_branch
        %130 = sbr.rel (%p128) target = $region28
      $region27: #{conv_conv_forward.5} parent=23 // pred_region
        %p131 = scmp.lt.s32.totalorder %s9, 1
        %s132 = scalar_select %p131, %s9, 1
        %s133 = smul.addr %s132, 2
        %s134 = smul.addr %s133, 4
        %s135 = scalar_lea.vmem %s2, %s134
      $region28: #{conv_conv_forward.5} parent=23 // pred_fallthru
        _
    $region24: #{conv_conv_forward.5} parent=5 // pred_fallthru
      _
    %p136 = scmp.le.s32.totalorder 1, %s9
    %p137 = scmp.lt.s32.totalorder %s9, 3
    %p138 = pnand %p136, %p137
    %p139 = pneg %p138
    // Predicated region
    $region29: #{conv_conv_forward.5} parent=5 // pred_check
      _
    $region30: #{conv_conv_forward.5} parent=5 // pred_check_branch
      %141 = sbr.rel (%p138) target = $region32
    $region31: #{conv_conv_forward.5} parent=5 // pred_region
      %s142 = ssub.s32 %s9, 1
      %p143 = pneg %p30
      %p144 = pneg %p27
      %p145 = pneg %p51
      %p146 = pneg %p48
      %p147 = scmp.lt.s32.totalorder %s14, 1
      %s148 = scalar_select %p147, %s14, 1
      %s149 = smul.addr %s148, 2
      %s150 = smul.addr %s149, 4
      %s151 = scalar_lea.vmem %s2, %s150
      %p152 = pneg %p77
      %p153 = pneg %p74
      %p154 = pneg %p103
      %p155 = pneg %p100
      %p156 = scmp.lt.s32.totalorder %s14, 1
      %s157 = scalar_select %p156, %s14, 1
      %s158 = smul.addr %s157, 2
      %s159 = smul.addr %s158, 8
      %s160 = scalar_lea.vmem %s3, %s159
      %p161 = scmp.lt.s32.totalorder %s14, 1
      %s162 = scalar_select %p161, %s14, 1
      %s163 = smul.addr %s162, 2
      %s164 = smul.addr %s163, 4
      %s165 = scalar_lea.vmem %s2, %s164
      %p166 = scmp.lt.s32.totalorder %s14, 1
      %s167 = scalar_select %p166, %s14, 1
      %s168 = smul.addr %s167, 2
      %s169 = smul.addr %s168, 8
      %s170 = scalar_lea.vmem %s3, %s169
      %v171 = vld [vmem:[%s165] sm:$0xf]
      %v172 = vld [vmem:[%s165 + $0x4] sm:$0xf]
      %v173 = vunpack.c.l.bf16 %v171
      %v174 = vunpack.c.l.bf16 %v172
      %v175 = vld [vmem:[%s0] sm:$0x1]
      %v177 = vlaneseq
      %v178 = vshrl.u32 %v177, 7
      %v179 = vsub.s32 0, %v178
      %v180 = vrot.slane %v175, %v179
      %v182 = vmul.f32 %v173, %v180
      %v183 = vmul.f32 %v174, %v180
      %v184 = vld [vmem:[%s1] sm:$0x1]
      %v186 = vlaneseq
      %v187 = vshrl.u32 %v186, 7
      %v188 = vsub.s32 0, %v187
      %v189 = vrot.slane %v184, %v188
      %v191 = vadd.f32 %v182, %v189
      %v192 = vadd.f32 %v183, %v189
      %v193 = vmax.f32 %v191, 0.0
      %v194 = vmax.f32 %v192, 0.0
      %195 = vst [vmem:[%s170] sm:$0xff] %v193
      %196 = vst [vmem:[%s170 + $0x8] sm:$0xff] %v194
      %p197 = scmp.lt.s32.totalorder %s14, 1
      %s198 = scalar_select %p197, %s14, 1
      %s199 = smul.addr %s198, 2
      %s200 = smul.addr %s199, 8
      %s201 = scalar_lea.vmem %s3, %s200
      // Predicated region
      $region33: #{conv_conv_forward.5} parent=31 // pred_check
        %p202 = pneg %p100
      $region34: #{conv_conv_forward.5} parent=31 // pred_check_branch
        %204 = sbr.rel (%p202) target = $region36
      $region35: #{conv_conv_forward.5} parent=31 // pred_region
        _
      $region36: #{conv_conv_forward.5} parent=31 // pred_fallthru
        _
    $region32: #{conv_conv_forward.5} parent=5 // pred_fallthru
      _
    %p205 = scmp.le.s32.totalorder 2, %s9
    // Predicated region
    $region37: #{conv_conv_forward.5} parent=5 // pred_check
      %p206 = pneg %p205
    $region38: #{conv_conv_forward.5} parent=5 // pred_check_branch
      %208 = sbr.rel (%p206) target = $region40
    $region39: #{conv_conv_forward.5} parent=5 // pred_region
      %s209 = ssub.s32 %s9, 2
      // Predicated region
      $region41: #{conv_conv_forward.5} parent=39 // pred_check
        %p210 = pneg %p106
      $region42: #{conv_conv_forward.5} parent=39 // pred_check_branch
        %212 = sbr.rel (%p210) target = $region44
      $region43: #{conv_conv_forward.5} parent=39 // pred_region
        %p213 = scmp.lt.s32.totalorder %s15, 1
        %s214 = scalar_select %p213, %s15, 1
        %s215 = smul.addr %s214, 2
        %s216 = smul.addr %s215, 8
        %s217 = scalar_lea.vmem %s3, %s216
      $region44: #{conv_conv_forward.5} parent=39 // pred_fallthru
        _
    $region40: #{conv_conv_forward.5} parent=5 // pred_fallthru
      _
  $region6: #{conv_conv_forward.5} parent=0 // loop_footer
    %s13 = sadd.s32 1, %s9
  $region7: #{conv_conv_forward.5} parent=0 // loop_footer_branch
    %8 = sbr.rel target = $region3
  $region8: #{conv_conv_forward.5} parent=0 // loop_exit
    _

</llo_original>
